<compile_context>
chip_gen: v7x
topology: tpu7x:2x2x1
jax: 0.10.0
libtpu: 0.0.40
codegen_flags: <defaults>
</compile_context>

<pallas_src>
import jax
import jax.numpy as jnp
from jax.experimental import pallas as pl
from jax.experimental.pallas import tpu as pltpu

LRELU_SLOPE = 0.01     # PyTorch nn.LeakyReLU default
BN_EPS = 1e-5          # PyTorch nn.BatchNorm2d default
LANES = 128            # keep output columns lane-dense
TILE_M_MAX = 1024      # ~85% HBM roofline vs ~63% at 256 (measured Pallas data)
VMEM_LIMIT = 32 * 1024 * 1024   # explicit budget, safe on v5e/v6e/v7x


# ---------------------------------------------------------------------------
# small static helpers
# ---------------------------------------------------------------------------
def _round_up(x, m):
    return ((x + m - 1) // m) * m


def _pad_rows(a, rows):
    return jnp.pad(a, ((0, rows - a.shape[0]), (0, 0)))


def _pad_cols(a, cols):
    return jnp.pad(a, ((0, 0), (0, cols - a.shape[1])))


def _pad_vec(v, cols):
    return jnp.pad(v, (0, cols - v.shape[0])).reshape(1, cols)


# ---------------------------------------------------------------------------
# Pallas kernels
# ---------------------------------------------------------------------------
def _fused_matmul_bn_lrelu(patches, w_col, gamma, beta, groups, cout, n_samples):
    """LeakyReLU(BN_train(patches @ w_col)) with lane-padded channel columns.

    patches: [M, K] bf16 (zero row-padded to tiles inside)
    w_col:   [K, COL] bf16, COL = multiple of 128 (zero-padded channel columns,
             `groups` phase groups of `cout` channels each)
    gamma, beta: [cout] f32 BN parameters
    n_samples:   real output pixels per channel (BN divisor)
    Returns [M, COL] bf16.
    """
    m, k = patches.shape
    col = w_col.shape[1]
    tile_m = min(TILE_M_MAX, _round_up(m, 16))   # 16: bf16 packs 2 rows / sublane
    m_pad = _round_up(m, tile_m)
    n_tiles = m_pad // tile_m
    patches = _pad_rows(patches, m_pad)

    # ---- pass A: matmul + per-tile partial BN stats (single patch stream) ----
    def mm_kernel(p_ref, w_ref, y_ref, st_ref):
        y = jnp.dot(p_ref[...], w_ref[...], preferred_element_type=jnp.float32)
        y_ref[...] = y.astype(y_ref.dtype)
        s = jnp.sum(y, axis=0, keepdims=True)          # (1, col) f32
        q = jnp.sum(y * y, axis=0, keepdims=True)      # (1, col) f32
        rows = jax.lax.broadcasted_iota(jnp.int32, st_ref.shape, 0)
        st_ref[...] = jnp.where(rows == 0, s, jnp.where(rows == 1, q, 0.0))

    mm_cost = pl.CostEstimate(
        flops=2 * m_pad * k * col + 3 * m_pad * col,
        transcendentals=0,
        bytes_accessed=m_pad * k * 2 + k * col * 2 + m_pad * col * 2
                       + n_tiles * 8 * col * 4,
    )
    y, stats = pl.pallas_call(
        mm_kernel,
        grid=(n_tiles,),
        in_specs=[pl.BlockSpec((tile_m, k), lambda i: (i, 0)),
                  pl.BlockSpec((k, col), lambda i: (0, 0))],
        out_specs=(pl.BlockSpec((tile_m, col), lambda i: (i, 0)),
                   pl.BlockSpec((8, col), lambda i: (i, 0))),
        out_shape=(jax.ShapeDtypeStruct((m_pad, col), jnp.bfloat16),
                   jax.ShapeDtypeStruct((n_tiles * 8, col), jnp.float32)),
        compiler_params=pltpu.CompilerParams(
            dimension_semantics=("parallel",),
            vmem_limit_bytes=VMEM_LIMIT),
        cost_estimate=mm_cost,
    )(patches, w_col)

    # ---- tiny glue on (col,)-sized vectors: reduce partials, group-combine,
    #      compute scale/shift once (hoisted out of the per-tile loop) ----
    part = stats.reshape(n_tiles, 8, col)
    sums = part[:, 0, :].sum(axis=0)[:groups * cout].reshape(groups, cout).sum(0)
    ssqs = part[:, 1, :].sum(axis=0)[:groups * cout].reshape(groups, cout).sum(0)
    inv_n = 1.0 / float(n_samples)
    mean = sums * inv_n
    # single-pass E[y^2]-mean^2 (f32 accumulators, clamped); a shifted/Welford
    # form would be safer if activations drift to very large magnitudes.
    var = jnp.maximum(ssqs * inv_n - mean * mean, 0.0)
    scale_c = gamma * jax.lax.rsqrt(var + BN_EPS)
    shift_c = beta - mean * scale_c
    scale = _pad_vec(jnp.tile(scale_c, groups), col)
    shift = _pad_vec(jnp.tile(shift_c, groups), col)

    # ---- pass B: y*scale + shift + LeakyReLU (independent tiles -> megacore) ----
    def bn_kernel(y_ref, sc_ref, sh_ref, o_ref):
        z = y_ref[...].astype(jnp.float32) * sc_ref[...] + sh_ref[...]
        o_ref[...] = jnp.where(z >= 0, z, LRELU_SLOPE * z).astype(o_ref.dtype)

    bn_cost = pl.CostEstimate(
        flops=3 * m_pad * col,
        transcendentals=0,
        bytes_accessed=2 * m_pad * col * 2 + 2 * col * 4,
    )
    out = pl.pallas_call(
        bn_kernel,
        grid=(n_tiles,),
        in_specs=[pl.BlockSpec((tile_m, col), lambda i: (i, 0)),
                  pl.BlockSpec((1, col), lambda i: (0, 0)),
                  pl.BlockSpec((1, col), lambda i: (0, 0))],
        out_specs=pl.BlockSpec((tile_m, col), lambda i: (i, 0)),
        out_shape=jax.ShapeDtypeStruct((m_pad, col), jnp.bfloat16),
        compiler_params=pltpu.CompilerParams(
            dimension_semantics=("parallel",),
            vmem_limit_bytes=VMEM_LIMIT),
        cost_estimate=bn_cost,
    )(y, scale, shift)
    return out[:m]


def _matmul_bias_tanh(patches, w_col, bias_col):
    """tanh(patches @ w_col + bias) -- final layer (no BN), independent tiles."""
    m, k = patches.shape
    col = w_col.shape[1]
    tile_m = min(TILE_M_MAX, _round_up(m, 16))
    m_pad = _round_up(m, tile_m)
    n_tiles = m_pad // tile_m
    patches = _pad_rows(patches, m_pad)

    def kernel(p_ref, w_ref, b_ref, o_ref):
        y = jnp.dot(p_ref[...], w_ref[...], preferred_element_type=jnp.float32)
        o_ref[...] = jnp.tanh(y + b_ref[...])

    cost = pl.CostEstimate(
        flops=2 * m_pad * k * col,
        transcendentals=m_pad * col,
        bytes_accessed=m_pad * k * 2 + k * col * 2 + m_pad * col * 4 + col * 4,
    )
    return pl.pallas_call(
        kernel,
        grid=(n_tiles,),
        in_specs=[pl.BlockSpec((tile_m, k), lambda i: (i, 0)),
                  pl.BlockSpec((k, col), lambda i: (0, 0)),
                  pl.BlockSpec((1, col), lambda i: (0, 0))],
        out_specs=pl.BlockSpec((tile_m, col), lambda i: (i, 0)),
        out_shape=jax.ShapeDtypeStruct((m_pad, col), jnp.float32),
        compiler_params=pltpu.CompilerParams(
            dimension_semantics=("parallel",),
            vmem_limit_bytes=VMEM_LIMIT),
        cost_estimate=cost,
    )(patches, w_col, bias_col)[:m]


# ---------------------------------------------------------------------------
# NHWC layer wrappers (im2col / phase decomposition / reshapes) -- all bf16
# ---------------------------------------------------------------------------
def _im2col_nhwc(x_pad, h_out, w_out, stride):
    # x_pad: [N, Hp, Wp, C] bf16 -> [N*Ho*Wo, 9*C], K order = (kh, kw, c)
    cols = []
    for kh in range(3):
        for kw in range(3):
            cols.append(x_pad[:, kh:kh + stride * (h_out - 1) + 1:stride,
                              kw:kw + stride * (w_out - 1) + 1:stride, :])
    p = jnp.stack(cols, axis=3)                       # [N, Ho, Wo, 9, C]
    n, c = x_pad.shape[0], x_pad.shape[3]
    return p.reshape(n * h_out * w_out, 9 * c)
    # TODO(synk): move im2col into the kernel (manual DMA of 3 input row bands per
    # output tile with memory_space=pl.ANY) to avoid the HBM patch expansion.


def conv_s2_bn_lrelu(x, w, gamma, beta):
    """Conv2d(k=3,s=2,p=1, bias dropped) + BatchNorm2d(train) + LeakyReLU. NHWC bf16."""
    n, h, wd, cin = x.shape
    cout = w.shape[0]
    ho, wo = (h - 1) // 2 + 1, (wd - 1) // 2 + 1
    xp = jnp.pad(x, ((0, 0), (1, 1), (1, 1), (0, 0)))
    patches = _im2col_nhwc(xp, ho, wo, 2)
    col = _round_up(cout, LANES)
    w_col = _pad_cols(w.transpose(2, 3, 1, 0).reshape(9 * cin, cout),
                      col).astype(jnp.bfloat16)
    y = _fused_matmul_bn_lrelu(patches, w_col, gamma, beta, 1, cout, n * ho * wo)
    return y[:, :cout].reshape(n, ho, wo, cout)


def _convT_phase_weight(w):
    # w: [Cin, Cout, 3, 3] (PyTorch ConvTranspose2d layout) -> [4*Cin, 4*Cout]
    # block weight for the sub-pixel phase decomposition.
    # Rows: 2x2 input-window taps (di, dj); columns: output phases (py, px).
    cin, cout = w.shape[0], w.shape[1]
    zero = jnp.zeros((cin, cout), w.dtype)
    rows = []
    for di in (0, 1):
        for dj in (0, 1):
            cols = []
            for py in (0, 1):
                for px in (0, 1):
                    if di <= py and dj <= px:
                        ky = 1 if py == 0 else (0 if di == 1 else 2)
                        kx = 1 if px == 0 else (0 if dj == 1 else 2)
                        cols.append(w[:, :, ky, kx])
                    else:
                        cols.append(zero)
            rows.append(jnp.concatenate(cols, axis=1))
    return jnp.concatenate(rows, axis=0)


def convT_bn_lrelu(x, w, gamma, beta):
    """ConvTranspose2d(k=3,s=2,p=1,op=1, bias dropped) + BN(train) + LeakyReLU.

    Sub-pixel phase decomposition: one matmul over the UNdilated input with
    K = 4*Cin and 4 output-phase column groups (no 75%-zero dilated patches).
    """
    n, h, wd, cin = x.shape
    cout = w.shape[1]
    xp = jnp.pad(x, ((0, 0), (0, 1), (0, 1), (0, 0)))   # bottom/right zero edge
    taps = [xp[:, :h, :wd, :], xp[:, :h, 1:wd + 1, :],
            xp[:, 1:h + 1, :wd, :], xp[:, 1:h + 1, 1:wd + 1, :]]
    patches = jnp.stack(taps, axis=3).reshape(n * h * wd, 4 * cin)
    col = _round_up(4 * cout, LANES)
    w_col = _pad_cols(_convT_phase_weight(w), col).astype(jnp.bfloat16)
    y = _fused_matmul_bn_lrelu(patches, w_col, gamma, beta, 4, cout,
                               n * (2 * h) * (2 * wd))
    y = y[:, :4 * cout].reshape(n, h, wd, 2, 2, cout)
    return y.transpose(0, 1, 3, 2, 4, 5).reshape(n, 2 * h, 2 * wd, cout)


def conv_s1_tanh(x, w, b):
    """Conv2d(k=3,s=1,p=1) + Tanh (final layer of `fl`). NHWC, f32 output."""
    n, h, wd, cin = x.shape
    cout = w.shape[0]
    xp = jnp.pad(x, ((0, 0), (1, 1), (1, 1), (0, 0)))
    patches = _im2col_nhwc(xp, h, wd, 1)
    col = _round_up(cout, LANES)
    w_col = _pad_cols(w.transpose(2, 3, 1, 0).reshape(9 * cin, cout),
                      col).astype(jnp.bfloat16)
    y = _matmul_bias_tanh(patches, w_col, _pad_vec(b, col))
    return y[:, :cout].reshape(n, h, wd, cout)


# ---------------------------------------------------------------------------
# Deterministic parameter init + AE forward (mirrors AE.__init__ / forward)
# ---------------------------------------------------------------------------
def init_params(key, input_channels, out_channels, hidden_dims):
    def conv_w(k, cout, cin):
        bound = 1.0 / ((cin * 9) ** 0.5)
        return jax.random.uniform(k, (cout, cin, 3, 3), jnp.float32, -bound, bound)

    def convT_w(k, cin, cout):
        bound = 1.0 / ((cout * 9) ** 0.5)
        return jax.random.uniform(k, (cin, cout, 3, 3), jnp.float32, -bound, bound)

    def bn(c):
        # PyTorch BatchNorm2d defaults: gamma=1, beta=0
        return jnp.ones((c,), jnp.float32), jnp.zeros((c,), jnp.float32)

    n_layers = len(hidden_dims) + max(len(hidden_dims) - 1, 0) + 2
    keys = jax.random.split(key, n_layers + 1)
    params = {"encoder": [], "decoder": []}
    ki = 0

    # encoder: input_channels -> hidden[0] -> ... -> hidden[-1]
    enc = [input_channels] + list(hidden_dims)
    for cin, cout in zip(enc[:-1], enc[1:]):
        w = conv_w(keys[ki], cout, cin); ki += 1
        g, b = bn(cout)
        # conv bias omitted: exact no-op before training-mode BatchNorm
        params["encoder"].append((w, g, b))

    # decoder: reversed(hidden)[i] -> reversed(hidden)[i+1]
    rev = list(reversed(hidden_dims))
    for cin, cout in zip(rev[:-1], rev[1:]):
        w = convT_w(keys[ki], cin, cout); ki += 1
        g, b = bn(cout)
        params["decoder"].append((w, g, b))

    # fl: ConvTranspose2d(rev[-1], rev[-1]) + BN + LeakyReLU, Conv2d(rev[-1], out) + Tanh
    c_last = rev[-1]
    w = convT_w(keys[ki], c_last, c_last); ki += 1
    g, b = bn(c_last)
    params["fl_convT"] = (w, g, b)
    k1, k2 = jax.random.split(keys[ki])
    bound = 1.0 / ((c_last * 9) ** 0.5)
    wf = jax.random.uniform(k1, (out_channels, c_last, 3, 3), jnp.float32, -bound, bound)
    bf = jax.random.uniform(k2, (out_channels,), jnp.float32, -bound, bound)
    params["fl_conv"] = (wf, bf)
    return params


def ae_forward(x, params):
    # single NCHW -> NHWC transpose + one bf16 cast at the model boundary;
    # activations stay bf16 NHWC between layers (BN/act math is f32 in-kernel).
    h = jnp.transpose(x, (0, 2, 3, 1)).astype(jnp.bfloat16)
    for (w, g, b) in params["encoder"]:
        h = conv_s2_bn_lrelu(h, w, g, b)
    a = h                                   # latent
    for (w, g, b) in params["decoder"]:
        a = convT_bn_lrelu(a, w, g, b)
    w, g, b = params["fl_convT"]
    a = convT_bn_lrelu(a, w, g, b)
    w, b = params["fl_conv"]
    a = conv_s1_tanh(a, w, b)               # f32
    return jnp.transpose(a, (0, 3, 1, 2)), x   # back to NCHW, return (recon, input)


if __name__ == "__main__":
    key = jax.random.PRNGKey(0)
    k_param, k_x = jax.random.split(key)

    input_channels, out_channels = 4, 4
    hidden_dims = [8, 16]
    x = jax.random.normal(k_x, (2, input_channels, 16, 16), jnp.float32)

    params = init_params(k_param, input_channels, out_channels, hidden_dims)
    recon, original = jax.jit(ae_forward)(x, params)
    jax.block_until_ready((recon, original))

    assert recon.shape == (2, out_channels, 16, 16), recon.shape
    assert original.shape == x.shape
    assert bool(jnp.all(jnp.isfinite(recon)))
    print("KERNEL_OK")
</pallas_src>

<mosaic_0001>
module attributes {stable_mosaic.version = 11 : i64} {
  func.func @mm_kernel(%arg0: i32, %arg1: memref<128x36xbf16, #tpu.memory_space<vmem>>, %arg2: memref<36x128xbf16, #tpu.memory_space<vmem>>, %arg3: memref<128x128xbf16, #tpu.memory_space<vmem>>, %arg4: memref<8x128xf32, #tpu.memory_space<vmem>>) attributes {dimension_semantics = [#tpu.dimension_semantics<parallel>], iteration_bounds = array<i64: 1>, scalar_prefetch = 0 : i64, scratch_operands = 0 : i64, tpu.core_type = #tpu.core_type<tc>, window_params = [{transform_indices = @transform_0, window_bounds = array<i64: 128, 36>}, {pipeline_mode = #tpu.pipeline_mode<synchronous>, transform_indices = @transform_1, window_bounds = array<i64: 36, 128>}, {transform_indices = @transform_2, window_bounds = array<i64: 128, 128>}, {transform_indices = @transform_3, window_bounds = array<i64: 8, 128>}]} {
    %c0 = arith.constant 0 : index
    %c0_0 = arith.constant 0 : index
    %0 = vector.load %arg1[%c0, %c0_0] : memref<128x36xbf16, #tpu.memory_space<vmem>>, vector<128x36xbf16>
    %c0_1 = arith.constant 0 : index
    %c0_2 = arith.constant 0 : index
    %1 = vector.load %arg2[%c0_1, %c0_2] : memref<36x128xbf16, #tpu.memory_space<vmem>>, vector<36x128xbf16>
    %cst = arith.constant dense<0.000000e+00> : vector<128x128xf32>
    %2 = tpu.matmul %0, %1, %cst {dimension_numbers = #tpu.dot_dimension_numbers<[1], [0], [0], [1], [0, 0, 1, 1], [], []>} : vector<128x36xbf16>, vector<36x128xbf16>, vector<128x128xf32> -> vector<128x128xf32>
    %3 = arith.truncf %2 : vector<128x128xf32> to vector<128x128xbf16>
    %c0_3 = arith.constant 0 : index
    %c0_4 = arith.constant 0 : index
    %4 = vector.load %arg3[%c0_3, %c0_4] : memref<128x128xbf16, #tpu.memory_space<vmem>>, vector<128x128xbf16>
    tpu.vector_store %arg3[%c0_3, %c0_4], %3 {strides = array<i32>} : memref<128x128xbf16, #tpu.memory_space<vmem>>, vector<128x128xbf16>,
    %cst_5 = arith.constant dense<0.000000e+00> : vector<128xf32>
    %5 = vector.multi_reduction <add>, %2, %cst_5 [0] : vector<128x128xf32> to vector<128xf32>
    %6 = vector.shape_cast %5 : vector<128xf32> to vector<1x128xf32>
    %7 = arith.mulf %2, %2 : vector<128x128xf32>
    %cst_6 = arith.constant dense<0.000000e+00> : vector<128xf32>
    %8 = vector.multi_reduction <add>, %7, %cst_6 [0] : vector<128x128xf32> to vector<128xf32>
    %9 = vector.shape_cast %8 : vector<128xf32> to vector<1x128xf32>
    %10 = tpu.iota {dimensions = array<i32: 0>} : vector<8x128xi32>
    %c0_i32 = arith.constant 0 : i32
    %11 = vector.broadcast %c0_i32 : i32 to vector<8x128xi32>
    %12 = arith.cmpi eq, %10, %11 : vector<8x128xi32>
    %c1_i32 = arith.constant 1 : i32
    %13 = vector.broadcast %c1_i32 : i32 to vector<8x128xi32>
    %14 = arith.cmpi eq, %10, %13 : vector<8x128xi32>
    %cst_7 = arith.constant 0.000000e+00 : f32
    %15 = vector.shape_cast %9 : vector<1x128xf32> to vector<1x128xf32>
    %16 = vector.broadcast %15 : vector<1x128xf32> to vector<8x128xf32>
    %17 = vector.broadcast %cst_7 : f32 to vector<8x128xf32>
    %18 = arith.select %14, %16, %17 : vector<8x128xi1>, vector<8x128xf32>
    %19 = vector.shape_cast %6 : vector<1x128xf32> to vector<1x128xf32>
    %20 = vector.broadcast %19 : vector<1x128xf32> to vector<8x128xf32>
    %21 = arith.select %12, %20, %18 : vector<8x128xi1>, vector<8x128xf32>
    %c0_8 = arith.constant 0 : index
    %c0_9 = arith.constant 0 : index
    %22 = vector.load %arg4[%c0_8, %c0_9] : memref<8x128xf32, #tpu.memory_space<vmem>>, vector<8x128xf32>
    tpu.vector_store %arg4[%c0_8, %c0_9], %21 {strides = array<i32>} : memref<8x128xf32, #tpu.memory_space<vmem>>, vector<8x128xf32>,
    return
  }
  func.func @transform_0(%arg0: i32) -> (i32, i32) {
    %c0_i32 = arith.constant 0 : i32
    %c0_i32_0 = arith.constant 0 : i32
    return %arg0, %c0_i32 : i32, i32
  }
  func.func @transform_1(%arg0: i32) -> (i32, i32) {
    %c0_i32 = arith.constant 0 : i32
    %c0_i32_0 = arith.constant 0 : i32
    %c0_i32_1 = arith.constant 0 : i32
    return %c0_i32, %c0_i32_0 : i32, i32
  }
  func.func @transform_2(%arg0: i32) -> (i32, i32) {
    %c0_i32 = arith.constant 0 : i32
    %c0_i32_0 = arith.constant 0 : i32
    return %arg0, %c0_i32 : i32, i32
  }
  func.func @transform_3(%arg0: i32) -> (i32, i32) {
    %c0_i32 = arith.constant 0 : i32
    %c0_i32_0 = arith.constant 0 : i32
    return %arg0, %c0_i32 : i32, i32
  }
}

module attributes {stable_mosaic.version = 11 : i64} {
  func.func @bn_kernel(%arg0: i32, %arg1: memref<128x128xbf16, #tpu.memory_space<vmem>>, %arg2: memref<1x128xf32, #tpu.memory_space<vmem>>, %arg3: memref<1x128xf32, #tpu.memory_space<vmem>>, %arg4: memref<128x128xbf16, #tpu.memory_space<vmem>>) attributes {dimension_semantics = [#tpu.dimension_semantics<parallel>], iteration_bounds = array<i64: 1>, scalar_prefetch = 0 : i64, scratch_operands = 0 : i64, tpu.core_type = #tpu.core_type<tc>, window_params = [{transform_indices = @transform_0, window_bounds = array<i64: 128, 128>}, {pipeline_mode = #tpu.pipeline_mode<synchronous>, transform_indices = @transform_1, window_bounds = array<i64: 1, 128>}, {pipeline_mode = #tpu.pipeline_mode<synchronous>, transform_indices = @transform_2, window_bounds = array<i64: 1, 128>}, {transform_indices = @transform_3, window_bounds = array<i64: 128, 128>}]} {
    %c0 = arith.constant 0 : index
    %c0_0 = arith.constant 0 : index
    %0 = vector.load %arg1[%c0, %c0_0] : memref<128x128xbf16, #tpu.memory_space<vmem>>, vector<128x128xbf16>
    %1 = arith.extf %0 : vector<128x128xbf16> to vector<128x128xf32>
    %c0_1 = arith.constant 0 : index
    %c0_2 = arith.constant 0 : index
    %2 = vector.load %arg2[%c0_1, %c0_2] : memref<1x128xf32, #tpu.memory_space<vmem>>, vector<1x128xf32>
    %3 = vector.broadcast %2 : vector<1x128xf32> to vector<128x128xf32>
    %4 = arith.mulf %1, %3 : vector<128x128xf32>
    %c0_3 = arith.constant 0 : index
    %c0_4 = arith.constant 0 : index
    %5 = vector.load %arg3[%c0_3, %c0_4] : memref<1x128xf32, #tpu.memory_space<vmem>>, vector<1x128xf32>
    %6 = vector.broadcast %5 : vector<1x128xf32> to vector<128x128xf32>
    %7 = arith.addf %4, %6 : vector<128x128xf32>
    %cst = arith.constant 0.000000e+00 : f32
    %8 = vector.broadcast %cst : f32 to vector<128x128xf32>
    %9 = arith.cmpf oge, %7, %8 : vector<128x128xf32>
    %cst_5 = arith.constant 0.00999999977 : f32
    %10 = vector.broadcast %cst_5 : f32 to vector<128x128xf32>
    %11 = arith.mulf %10, %7 : vector<128x128xf32>
    %12 = arith.select %9, %7, %11 : vector<128x128xi1>, vector<128x128xf32>
    %13 = arith.truncf %12 : vector<128x128xf32> to vector<128x128xbf16>
    %c0_6 = arith.constant 0 : index
    %c0_7 = arith.constant 0 : index
    %14 = vector.load %arg4[%c0_6, %c0_7] : memref<128x128xbf16, #tpu.memory_space<vmem>>, vector<128x128xbf16>
    tpu.vector_store %arg4[%c0_6, %c0_7], %13 {strides = array<i32>} : memref<128x128xbf16, #tpu.memory_space<vmem>>, vector<128x128xbf16>,
    return
  }
  func.func @transform_0(%arg0: i32) -> (i32, i32) {
    %c0_i32 = arith.constant 0 : i32
    %c0_i32_0 = arith.constant 0 : i32
    return %arg0, %c0_i32 : i32, i32
  }
  func.func @transform_1(%arg0: i32) -> (i32, i32) {
    %c0_i32 = arith.constant 0 : i32
    %c0_i32_0 = arith.constant 0 : i32
    %c0_i32_1 = arith.constant 0 : i32
    return %c0_i32, %c0_i32_0 : i32, i32
  }
  func.func @transform_2(%arg0: i32) -> (i32, i32) {
    %c0_i32 = arith.constant 0 : i32
    %c0_i32_0 = arith.constant 0 : i32
    %c0_i32_1 = arith.constant 0 : i32
    return %c0_i32, %c0_i32_0 : i32, i32
  }
  func.func @transform_3(%arg0: i32) -> (i32, i32) {
    %c0_i32 = arith.constant 0 : i32
    %c0_i32_0 = arith.constant 0 : i32
    return %arg0, %c0_i32 : i32, i32
  }
}

module attributes {stable_mosaic.version = 11 : i64} {
  func.func @mm_kernel(%arg0: i32, %arg1: memref<32x72xbf16, #tpu.memory_space<vmem>>, %arg2: memref<72x128xbf16, #tpu.memory_space<vmem>>, %arg3: memref<32x128xbf16, #tpu.memory_space<vmem>>, %arg4: memref<8x128xf32, #tpu.memory_space<vmem>>) attributes {dimension_semantics = [#tpu.dimension_semantics<parallel>], iteration_bounds = array<i64: 1>, scalar_prefetch = 0 : i64, scratch_operands = 0 : i64, tpu.core_type = #tpu.core_type<tc>, window_params = [{transform_indices = @transform_0, window_bounds = array<i64: 32, 72>}, {pipeline_mode = #tpu.pipeline_mode<synchronous>, transform_indices = @transform_1, window_bounds = array<i64: 72, 128>}, {transform_indices = @transform_2, window_bounds = array<i64: 32, 128>}, {transform_indices = @transform_3, window_bounds = array<i64: 8, 128>}]} {
    %c0 = arith.constant 0 : index
    %c0_0 = arith.constant 0 : index
    %0 = vector.load %arg1[%c0, %c0_0] : memref<32x72xbf16, #tpu.memory_space<vmem>>, vector<32x72xbf16>
    %c0_1 = arith.constant 0 : index
    %c0_2 = arith.constant 0 : index
    %1 = vector.load %arg2[%c0_1, %c0_2] : memref<72x128xbf16, #tpu.memory_space<vmem>>, vector<72x128xbf16>
    %cst = arith.constant dense<0.000000e+00> : vector<32x128xf32>
    %2 = tpu.matmul %0, %1, %cst {dimension_numbers = #tpu.dot_dimension_numbers<[1], [0], [0], [1], [0, 0, 1, 1], [], []>} : vector<32x72xbf16>, vector<72x128xbf16>, vector<32x128xf32> -> vector<32x128xf32>
    %3 = arith.truncf %2 : vector<32x128xf32> to vector<32x128xbf16>
    %c0_3 = arith.constant 0 : index
    %c0_4 = arith.constant 0 : index
    %4 = vector.load %arg3[%c0_3, %c0_4] : memref<32x128xbf16, #tpu.memory_space<vmem>>, vector<32x128xbf16>
    tpu.vector_store %arg3[%c0_3, %c0_4], %3 {strides = array<i32>} : memref<32x128xbf16, #tpu.memory_space<vmem>>, vector<32x128xbf16>,
    %cst_5 = arith.constant dense<0.000000e+00> : vector<128xf32>
    %5 = vector.multi_reduction <add>, %2, %cst_5 [0] : vector<32x128xf32> to vector<128xf32>
    %6 = vector.shape_cast %5 : vector<128xf32> to vector<1x128xf32>
    %7 = arith.mulf %2, %2 : vector<32x128xf32>
    %cst_6 = arith.constant dense<0.000000e+00> : vector<128xf32>
    %8 = vector.multi_reduction <add>, %7, %cst_6 [0] : vector<32x128xf32> to vector<128xf32>
    %9 = vector.shape_cast %8 : vector<128xf32> to vector<1x128xf32>
    %10 = tpu.iota {dimensions = array<i32: 0>} : vector<8x128xi32>
    %c0_i32 = arith.constant 0 : i32
    %11 = vector.broadcast %c0_i32 : i32 to vector<8x128xi32>
    %12 = arith.cmpi eq, %10, %11 : vector<8x128xi32>
    %c1_i32 = arith.constant 1 : i32
    %13 = vector.broadcast %c1_i32 : i32 to vector<8x128xi32>
    %14 = arith.cmpi eq, %10, %13 : vector<8x128xi32>
    %cst_7 = arith.constant 0.000000e+00 : f32
    %15 = vector.shape_cast %9 : vector<1x128xf32> to vector<1x128xf32>
    %16 = vector.broadcast %15 : vector<1x128xf32> to vector<8x128xf32>
    %17 = vector.broadcast %cst_7 : f32 to vector<8x128xf32>
    %18 = arith.select %14, %16, %17 : vector<8x128xi1>, vector<8x128xf32>
    %19 = vector.shape_cast %6 : vector<1x128xf32> to vector<1x128xf32>
    %20 = vector.broadcast %19 : vector<1x128xf32> to vector<8x128xf32>
    %21 = arith.select %12, %20, %18 : vector<8x128xi1>, vector<8x128xf32>
    %c0_8 = arith.constant 0 : index
    %c0_9 = arith.constant 0 : index
    %22 = vector.load %arg4[%c0_8, %c0_9] : memref<8x128xf32, #tpu.memory_space<vmem>>, vector<8x128xf32>
    tpu.vector_store %arg4[%c0_8, %c0_9], %21 {strides = array<i32>} : memref<8x128xf32, #tpu.memory_space<vmem>>, vector<8x128xf32>,
    return
  }
  func.func @transform_0(%arg0: i32) -> (i32, i32) {
    %c0_i32 = arith.constant 0 : i32
    %c0_i32_0 = arith.constant 0 : i32
    return %arg0, %c0_i32 : i32, i32
  }
  func.func @transform_1(%arg0: i32) -> (i32, i32) {
    %c0_i32 = arith.constant 0 : i32
    %c0_i32_0 = arith.constant 0 : i32
    %c0_i32_1 = arith.constant 0 : i32
    return %c0_i32, %c0_i32_0 : i32, i32
  }
  func.func @transform_2(%arg0: i32) -> (i32, i32) {
    %c0_i32 = arith.constant 0 : i32
    %c0_i32_0 = arith.constant 0 : i32
    return %arg0, %c0_i32 : i32, i32
  }
  func.func @transform_3(%arg0: i32) -> (i32, i32) {
    %c0_i32 = arith.constant 0 : i32
    %c0_i32_0 = arith.constant 0 : i32
    return %arg0, %c0_i32 : i32, i32
  }
}

module attributes {stable_mosaic.version = 11 : i64} {
  func.func @bn_kernel(%arg0: i32, %arg1: memref<32x128xbf16, #tpu.memory_space<vmem>>, %arg2: memref<1x128xf32, #tpu.memory_space<vmem>>, %arg3: memref<1x128xf32, #tpu.memory_space<vmem>>, %arg4: memref<32x128xbf16, #tpu.memory_space<vmem>>) attributes {dimension_semantics = [#tpu.dimension_semantics<parallel>], iteration_bounds = array<i64: 1>, scalar_prefetch = 0 : i64, scratch_operands = 0 : i64, tpu.core_type = #tpu.core_type<tc>, window_params = [{transform_indices = @transform_0, window_bounds = array<i64: 32, 128>}, {pipeline_mode = #tpu.pipeline_mode<synchronous>, transform_indices = @transform_1, window_bounds = array<i64: 1, 128>}, {pipeline_mode = #tpu.pipeline_mode<synchronous>, transform_indices = @transform_2, window_bounds = array<i64: 1, 128>}, {transform_indices = @transform_3, window_bounds = array<i64: 32, 128>}]} {
    %c0 = arith.constant 0 : index
    %c0_0 = arith.constant 0 : index
    %0 = vector.load %arg1[%c0, %c0_0] : memref<32x128xbf16, #tpu.memory_space<vmem>>, vector<32x128xbf16>
    %1 = arith.extf %0 : vector<32x128xbf16> to vector<32x128xf32>
    %c0_1 = arith.constant 0 : index
    %c0_2 = arith.constant 0 : index
    %2 = vector.load %arg2[%c0_1, %c0_2] : memref<1x128xf32, #tpu.memory_space<vmem>>, vector<1x128xf32>
    %3 = vector.broadcast %2 : vector<1x128xf32> to vector<32x128xf32>
    %4 = arith.mulf %1, %3 : vector<32x128xf32>
    %c0_3 = arith.constant 0 : index
    %c0_4 = arith.constant 0 : index
    %5 = vector.load %arg3[%c0_3, %c0_4] : memref<1x128xf32, #tpu.memory_space<vmem>>, vector<1x128xf32>
    %6 = vector.broadcast %5 : vector<1x128xf32> to vector<32x128xf32>
    %7 = arith.addf %4, %6 : vector<32x128xf32>
    %cst = arith.constant 0.000000e+00 : f32
    %8 = vector.broadcast %cst : f32 to vector<32x128xf32>
    %9 = arith.cmpf oge, %7, %8 : vector<32x128xf32>
    %cst_5 = arith.constant 0.00999999977 : f32
    %10 = vector.broadcast %cst_5 : f32 to vector<32x128xf32>
    %11 = arith.mulf %10, %7 : vector<32x128xf32>
    %12 = arith.select %9, %7, %11 : vector<32x128xi1>, vector<32x128xf32>
    %13 = arith.truncf %12 : vector<32x128xf32> to vector<32x128xbf16>
    %c0_6 = arith.constant 0 : index
    %c0_7 = arith.constant 0 : index
    %14 = vector.load %arg4[%c0_6, %c0_7] : memref<32x128xbf16, #tpu.memory_space<vmem>>, vector<32x128xbf16>
    tpu.vector_store %arg4[%c0_6, %c0_7], %13 {strides = array<i32>} : memref<32x128xbf16, #tpu.memory_space<vmem>>, vector<32x128xbf16>,
    return
  }
  func.func @transform_0(%arg0: i32) -> (i32, i32) {
    %c0_i32 = arith.constant 0 : i32
    %c0_i32_0 = arith.constant 0 : i32
    return %arg0, %c0_i32 : i32, i32
  }
  func.func @transform_1(%arg0: i32) -> (i32, i32) {
    %c0_i32 = arith.constant 0 : i32
    %c0_i32_0 = arith.constant 0 : i32
    %c0_i32_1 = arith.constant 0 : i32
    return %c0_i32, %c0_i32_0 : i32, i32
  }
  func.func @transform_2(%arg0: i32) -> (i32, i32) {
    %c0_i32 = arith.constant 0 : i32
    %c0_i32_0 = arith.constant 0 : i32
    %c0_i32_1 = arith.constant 0 : i32
    return %c0_i32, %c0_i32_0 : i32, i32
  }
  func.func @transform_3(%arg0: i32) -> (i32, i32) {
    %c0_i32 = arith.constant 0 : i32
    %c0_i32_0 = arith.constant 0 : i32
    return %arg0, %c0_i32 : i32, i32
  }
}

module attributes {stable_mosaic.version = 11 : i64} {
  func.func @mm_kernel(%arg0: i32, %arg1: memref<32x64xbf16, #tpu.memory_space<vmem>>, %arg2: memref<64x128xbf16, #tpu.memory_space<vmem>>, %arg3: memref<32x128xbf16, #tpu.memory_space<vmem>>, %arg4: memref<8x128xf32, #tpu.memory_space<vmem>>) attributes {dimension_semantics = [#tpu.dimension_semantics<parallel>], iteration_bounds = array<i64: 1>, scalar_prefetch = 0 : i64, scratch_operands = 0 : i64, tpu.core_type = #tpu.core_type<tc>, window_params = [{transform_indices = @transform_0, window_bounds = array<i64: 32, 64>}, {pipeline_mode = #tpu.pipeline_mode<synchronous>, transform_indices = @transform_1, window_bounds = array<i64: 64, 128>}, {transform_indices = @transform_2, window_bounds = array<i64: 32, 128>}, {transform_indices = @transform_3, window_bounds = array<i64: 8, 128>}]} {
    %c0 = arith.constant 0 : index
    %c0_0 = arith.constant 0 : index
    %0 = vector.load %arg1[%c0, %c0_0] : memref<32x64xbf16, #tpu.memory_space<vmem>>, vector<32x64xbf16>
    %c0_1 = arith.constant 0 : index
    %c0_2 = arith.constant 0 : index
    %1 = vector.load %arg2[%c0_1, %c0_2] : memref<64x128xbf16, #tpu.memory_space<vmem>>, vector<64x128xbf16>
    %cst = arith.constant dense<0.000000e+00> : vector<32x128xf32>
    %2 = tpu.matmul %0, %1, %cst {dimension_numbers = #tpu.dot_dimension_numbers<[1], [0], [0], [1], [0, 0, 1, 1], [], []>} : vector<32x64xbf16>, vector<64x128xbf16>, vector<32x128xf32> -> vector<32x128xf32>
    %3 = arith.truncf %2 : vector<32x128xf32> to vector<32x128xbf16>
    %c0_3 = arith.constant 0 : index
    %c0_4 = arith.constant 0 : index
    %4 = vector.load %arg3[%c0_3, %c0_4] : memref<32x128xbf16, #tpu.memory_space<vmem>>, vector<32x128xbf16>
    tpu.vector_store %arg3[%c0_3, %c0_4], %3 {strides = array<i32>} : memref<32x128xbf16, #tpu.memory_space<vmem>>, vector<32x128xbf16>,
    %cst_5 = arith.constant dense<0.000000e+00> : vector<128xf32>
    %5 = vector.multi_reduction <add>, %2, %cst_5 [0] : vector<32x128xf32> to vector<128xf32>
    %6 = vector.shape_cast %5 : vector<128xf32> to vector<1x128xf32>
    %7 = arith.mulf %2, %2 : vector<32x128xf32>
    %cst_6 = arith.constant dense<0.000000e+00> : vector<128xf32>
    %8 = vector.multi_reduction <add>, %7, %cst_6 [0] : vector<32x128xf32> to vector<128xf32>
    %9 = vector.shape_cast %8 : vector<128xf32> to vector<1x128xf32>
    %10 = tpu.iota {dimensions = array<i32: 0>} : vector<8x128xi32>
    %c0_i32 = arith.constant 0 : i32
    %11 = vector.broadcast %c0_i32 : i32 to vector<8x128xi32>
    %12 = arith.cmpi eq, %10, %11 : vector<8x128xi32>
    %c1_i32 = arith.constant 1 : i32
    %13 = vector.broadcast %c1_i32 : i32 to vector<8x128xi32>
    %14 = arith.cmpi eq, %10, %13 : vector<8x128xi32>
    %cst_7 = arith.constant 0.000000e+00 : f32
    %15 = vector.shape_cast %9 : vector<1x128xf32> to vector<1x128xf32>
    %16 = vector.broadcast %15 : vector<1x128xf32> to vector<8x128xf32>
    %17 = vector.broadcast %cst_7 : f32 to vector<8x128xf32>
    %18 = arith.select %14, %16, %17 : vector<8x128xi1>, vector<8x128xf32>
    %19 = vector.shape_cast %6 : vector<1x128xf32> to vector<1x128xf32>
    %20 = vector.broadcast %19 : vector<1x128xf32> to vector<8x128xf32>
    %21 = arith.select %12, %20, %18 : vector<8x128xi1>, vector<8x128xf32>
    %c0_8 = arith.constant 0 : index
    %c0_9 = arith.constant 0 : index
    %22 = vector.load %arg4[%c0_8, %c0_9] : memref<8x128xf32, #tpu.memory_space<vmem>>, vector<8x128xf32>
    tpu.vector_store %arg4[%c0_8, %c0_9], %21 {strides = array<i32>} : memref<8x128xf32, #tpu.memory_space<vmem>>, vector<8x128xf32>,
    return
  }
  func.func @transform_0(%arg0: i32) -> (i32, i32) {
    %c0_i32 = arith.constant 0 : i32
    %c0_i32_0 = arith.constant 0 : i32
    return %arg0, %c0_i32 : i32, i32
  }
  func.func @transform_1(%arg0: i32) -> (i32, i32) {
    %c0_i32 = arith.constant 0 : i32
    %c0_i32_0 = arith.constant 0 : i32
    %c0_i32_1 = arith.constant 0 : i32
    return %c0_i32, %c0_i32_0 : i32, i32
  }
  func.func @transform_2(%arg0: i32) -> (i32, i32) {
    %c0_i32 = arith.constant 0 : i32
    %c0_i32_0 = arith.constant 0 : i32
    return %arg0, %c0_i32 : i32, i32
  }
  func.func @transform_3(%arg0: i32) -> (i32, i32) {
    %c0_i32 = arith.constant 0 : i32
    %c0_i32_0 = arith.constant 0 : i32
    return %arg0, %c0_i32 : i32, i32
  }
}

module attributes {stable_mosaic.version = 11 : i64} {
  func.func @mm_kernel(%arg0: i32, %arg1: memref<128x32xbf16, #tpu.memory_space<vmem>>, %arg2: memref<32x128xbf16, #tpu.memory_space<vmem>>, %arg3: memref<128x128xbf16, #tpu.memory_space<vmem>>, %arg4: memref<8x128xf32, #tpu.memory_space<vmem>>) attributes {dimension_semantics = [#tpu.dimension_semantics<parallel>], iteration_bounds = array<i64: 1>, scalar_prefetch = 0 : i64, scratch_operands = 0 : i64, tpu.core_type = #tpu.core_type<tc>, window_params = [{transform_indices = @transform_0, window_bounds = array<i64: 128, 32>}, {pipeline_mode = #tpu.pipeline_mode<synchronous>, transform_indices = @transform_1, window_bounds = array<i64: 32, 128>}, {transform_indices = @transform_2, window_bounds = array<i64: 128, 128>}, {transform_indices = @transform_3, window_bounds = array<i64: 8, 128>}]} {
    %c0 = arith.constant 0 : index
    %c0_0 = arith.constant 0 : index
    %0 = vector.load %arg1[%c0, %c0_0] : memref<128x32xbf16, #tpu.memory_space<vmem>>, vector<128x32xbf16>
    %c0_1 = arith.constant 0 : index
    %c0_2 = arith.constant 0 : index
    %1 = vector.load %arg2[%c0_1, %c0_2] : memref<32x128xbf16, #tpu.memory_space<vmem>>, vector<32x128xbf16>
    %cst = arith.constant dense<0.000000e+00> : vector<128x128xf32>
    %2 = tpu.matmul %0, %1, %cst {dimension_numbers = #tpu.dot_dimension_numbers<[1], [0], [0], [1], [0, 0, 1, 1], [], []>} : vector<128x32xbf16>, vector<32x128xbf16>, vector<128x128xf32> -> vector<128x128xf32>
    %3 = arith.truncf %2 : vector<128x128xf32> to vector<128x128xbf16>
    %c0_3 = arith.constant 0 : index
    %c0_4 = arith.constant 0 : index
    %4 = vector.load %arg3[%c0_3, %c0_4] : memref<128x128xbf16, #tpu.memory_space<vmem>>, vector<128x128xbf16>
    tpu.vector_store %arg3[%c0_3, %c0_4], %3 {strides = array<i32>} : memref<128x128xbf16, #tpu.memory_space<vmem>>, vector<128x128xbf16>,
    %cst_5 = arith.constant dense<0.000000e+00> : vector<128xf32>
    %5 = vector.multi_reduction <add>, %2, %cst_5 [0] : vector<128x128xf32> to vector<128xf32>
    %6 = vector.shape_cast %5 : vector<128xf32> to vector<1x128xf32>
    %7 = arith.mulf %2, %2 : vector<128x128xf32>
    %cst_6 = arith.constant dense<0.000000e+00> : vector<128xf32>
    %8 = vector.multi_reduction <add>, %7, %cst_6 [0] : vector<128x128xf32> to vector<128xf32>
    %9 = vector.shape_cast %8 : vector<128xf32> to vector<1x128xf32>
    %10 = tpu.iota {dimensions = array<i32: 0>} : vector<8x128xi32>
    %c0_i32 = arith.constant 0 : i32
    %11 = vector.broadcast %c0_i32 : i32 to vector<8x128xi32>
    %12 = arith.cmpi eq, %10, %11 : vector<8x128xi32>
    %c1_i32 = arith.constant 1 : i32
    %13 = vector.broadcast %c1_i32 : i32 to vector<8x128xi32>
    %14 = arith.cmpi eq, %10, %13 : vector<8x128xi32>
    %cst_7 = arith.constant 0.000000e+00 : f32
    %15 = vector.shape_cast %9 : vector<1x128xf32> to vector<1x128xf32>
    %16 = vector.broadcast %15 : vector<1x128xf32> to vector<8x128xf32>
    %17 = vector.broadcast %cst_7 : f32 to vector<8x128xf32>
    %18 = arith.select %14, %16, %17 : vector<8x128xi1>, vector<8x128xf32>
    %19 = vector.shape_cast %6 : vector<1x128xf32> to vector<1x128xf32>
    %20 = vector.broadcast %19 : vector<1x128xf32> to vector<8x128xf32>
    %21 = arith.select %12, %20, %18 : vector<8x128xi1>, vector<8x128xf32>
    %c0_8 = arith.constant 0 : index
    %c0_9 = arith.constant 0 : index
    %22 = vector.load %arg4[%c0_8, %c0_9] : memref<8x128xf32, #tpu.memory_space<vmem>>, vector<8x128xf32>
    tpu.vector_store %arg4[%c0_8, %c0_9], %21 {strides = array<i32>} : memref<8x128xf32, #tpu.memory_space<vmem>>, vector<8x128xf32>,
    return
  }
  func.func @transform_0(%arg0: i32) -> (i32, i32) {
    %c0_i32 = arith.constant 0 : i32
    %c0_i32_0 = arith.constant 0 : i32
    return %arg0, %c0_i32 : i32, i32
  }
  func.func @transform_1(%arg0: i32) -> (i32, i32) {
    %c0_i32 = arith.constant 0 : i32
    %c0_i32_0 = arith.constant 0 : i32
    %c0_i32_1 = arith.constant 0 : i32
    return %c0_i32, %c0_i32_0 : i32, i32
  }
  func.func @transform_2(%arg0: i32) -> (i32, i32) {
    %c0_i32 = arith.constant 0 : i32
    %c0_i32_0 = arith.constant 0 : i32
    return %arg0, %c0_i32 : i32, i32
  }
  func.func @transform_3(%arg0: i32) -> (i32, i32) {
    %c0_i32 = arith.constant 0 : i32
    %c0_i32_0 = arith.constant 0 : i32
    return %arg0, %c0_i32 : i32, i32
  }
}

module attributes {stable_mosaic.version = 11 : i64} {
  func.func @kernel(%arg0: i32, %arg1: memref<512x72xbf16, #tpu.memory_space<vmem>>, %arg2: memref<72x128xbf16, #tpu.memory_space<vmem>>, %arg3: memref<1x128xf32, #tpu.memory_space<vmem>>, %arg4: memref<512x128xf32, #tpu.memory_space<vmem>>) attributes {dimension_semantics = [#tpu.dimension_semantics<parallel>], iteration_bounds = array<i64: 1>, scalar_prefetch = 0 : i64, scratch_operands = 0 : i64, tpu.core_type = #tpu.core_type<tc>, window_params = [{transform_indices = @transform_0, window_bounds = array<i64: 512, 72>}, {pipeline_mode = #tpu.pipeline_mode<synchronous>, transform_indices = @transform_1, window_bounds = array<i64: 72, 128>}, {pipeline_mode = #tpu.pipeline_mode<synchronous>, transform_indices = @transform_2, window_bounds = array<i64: 1, 128>}, {transform_indices = @transform_3, window_bounds = array<i64: 512, 128>}]} {
    %c0 = arith.constant 0 : index
    %c0_0 = arith.constant 0 : index
    %0 = vector.load %arg1[%c0, %c0_0] : memref<512x72xbf16, #tpu.memory_space<vmem>>, vector<512x72xbf16>
    %c0_1 = arith.constant 0 : index
    %c0_2 = arith.constant 0 : index
    %1 = vector.load %arg2[%c0_1, %c0_2] : memref<72x128xbf16, #tpu.memory_space<vmem>>, vector<72x128xbf16>
    %cst = arith.constant dense<0.000000e+00> : vector<512x128xf32>
    %2 = tpu.matmul %0, %1, %cst {dimension_numbers = #tpu.dot_dimension_numbers<[1], [0], [0], [1], [0, 0, 1, 1], [], []>} : vector<512x72xbf16>, vector<72x128xbf16>, vector<512x128xf32> -> vector<512x128xf32>
    %c0_3 = arith.constant 0 : index
    %c0_4 = arith.constant 0 : index
    %3 = vector.load %arg3[%c0_3, %c0_4] : memref<1x128xf32, #tpu.memory_space<vmem>>, vector<1x128xf32>
    %4 = vector.broadcast %3 : vector<1x128xf32> to vector<512x128xf32>
    %5 = arith.addf %2, %4 : vector<512x128xf32>
    %6 = math.tanh %5 : vector<512x128xf32>
    %c0_5 = arith.constant 0 : index
    %c0_6 = arith.constant 0 : index
    %7 = vector.load %arg4[%c0_5, %c0_6] : memref<512x128xf32, #tpu.memory_space<vmem>>, vector<512x128xf32>
    tpu.vector_store %arg4[%c0_5, %c0_6], %6 {strides = array<i32>} : memref<512x128xf32, #tpu.memory_space<vmem>>, vector<512x128xf32>,
    return
  }
  func.func @transform_0(%arg0: i32) -> (i32, i32) {
    %c0_i32 = arith.constant 0 : i32
    %c0_i32_0 = arith.constant 0 : i32
    return %arg0, %c0_i32 : i32, i32
  }
  func.func @transform_1(%arg0: i32) -> (i32, i32) {
    %c0_i32 = arith.constant 0 : i32
    %c0_i32_0 = arith.constant 0 : i32
    %c0_i32_1 = arith.constant 0 : i32
    return %c0_i32, %c0_i32_0 : i32, i32
  }
  func.func @transform_2(%arg0: i32) -> (i32, i32) {
    %c0_i32 = arith.constant 0 : i32
    %c0_i32_0 = arith.constant 0 : i32
    %c0_i32_1 = arith.constant 0 : i32
    return %c0_i32, %c0_i32_0 : i32, i32
  }
  func.func @transform_3(%arg0: i32) -> (i32, i32) {
    %c0_i32 = arith.constant 0 : i32
    %c0_i32_0 = arith.constant 0 : i32
    return %arg0, %c0_i32 : i32, i32
  }
}

</mosaic_0001>

<llo_original>
// kernel: ae_forward.10
$region0: #{ae_forward.10}
  #allocation0 [shape = 'u32[]', space=smem, size = 0x4, offset = 0x4, fixed_abs, tag = 'smem constant byte address 0x4 - core index']
  #allocation1 [shape = 'u32[144,128]{1,0:T(1,128)}', space=vmem, size = 0x12000, scoped, tag = 'internal scratch']
  %s0 = inlined_call_operand.vmem [shape: bf16[128,128], index: 0, kind: input, shape index: {}]
  %s1 = inlined_call_operand.vmem [shape: f32[1,128], index: 1, kind: input, shape index: {}]
  %s2 = inlined_call_operand.vmem [shape: f32[1,128], index: 2, kind: input, shape index: {}]
  %s3 = inlined_call_operand.vmem [shape: bf16[128,128], index: 3, kind: output, shape index: {}]
  %s4 = sld [smem:[#allocation0]]
  $region22: #{ae_forward.10} parent=0
    _
  %s6 = ssub.s32 1, %s4
  %s7 = scalar_select 0, %s6, %s4
  // Predicated region
  $region2: #{ae_forward.10} parent=0 // pred_check
    _
  $region3: #{ae_forward.10} parent=0 // pred_check_branch
    %9 = sbr.rel (0) target = $region5
  $region4: #{ae_forward.10} parent=0 // pred_region
    _
  $region5: #{ae_forward.10} parent=0 // pred_fallthru
    _
  // Predicated region
  $region6: #{ae_forward.10} parent=0 // pred_check
    _
  $region7: #{ae_forward.10} parent=0 // pred_check_branch
    %11 = sbr.rel (0) target = $region9
  $region8: #{ae_forward.10} parent=0 // pred_region
    _
  $region9: #{ae_forward.10} parent=0 // pred_fallthru
    _
  // Predicated region
  $region10: #{ae_forward.10} parent=0 // pred_check
    _
  $region11: #{ae_forward.10} parent=0 // pred_check_branch
    %13 = sbr.rel (0) target = $region13
  $region12: #{ae_forward.10} parent=0 // pred_region
    _
  $region13: #{ae_forward.10} parent=0 // pred_fallthru
    _
  %v14 = vld [vmem:[%s0] sm:$0xf]
  %v15 = vld [vmem:[%s0 + $0x4] sm:$0xf]
  %v16 = vld [vmem:[%s0 + $0x8] sm:$0xf]
  %v17 = vld [vmem:[%s0 + $0xc] sm:$0xf]
  %v18 = vld [vmem:[%s0 + $0x10] sm:$0xf]
  %v19 = vld [vmem:[%s0 + $0x14] sm:$0xf]
  %v20 = vld [vmem:[%s0 + $0x18] sm:$0xf]
  %v21 = vld [vmem:[%s0 + $0x1c] sm:$0xf]
  %v22 = vld [vmem:[%s0 + $0x20] sm:$0xf]
  %v23 = vld [vmem:[%s0 + $0x24] sm:$0xf]
  %v24 = vld [vmem:[%s0 + $0x28] sm:$0xf]
  %v25 = vld [vmem:[%s0 + $0x2c] sm:$0xf]
  %v26 = vld [vmem:[%s0 + $0x30] sm:$0xf]
  %v27 = vld [vmem:[%s0 + $0x34] sm:$0xf]
  %v28 = vld [vmem:[%s0 + $0x38] sm:$0xf]
  %v29 = vld [vmem:[%s0 + $0x3c] sm:$0xf]
  %v30 = vunpack.c.l.bf16 %v14
  %v31 = vunpack.c.l.bf16 %v15
  %v32 = vunpack.c.l.bf16 %v16
  %v33 = vunpack.c.l.bf16 %v17
  %v34 = vunpack.c.l.bf16 %v18
  %v35 = vunpack.c.l.bf16 %v19
  %v36 = vunpack.c.l.bf16 %v20
  %v37 = vunpack.c.l.bf16 %v21
  %v38 = vunpack.c.l.bf16 %v22
  %v39 = vunpack.c.l.bf16 %v23
  %v40 = vunpack.c.l.bf16 %v24
  %v41 = vunpack.c.l.bf16 %v25
  %v42 = vunpack.c.l.bf16 %v26
  %v43 = vunpack.c.l.bf16 %v27
  %v44 = vunpack.c.l.bf16 %v28
  %v45 = vunpack.c.l.bf16 %v29
  %v46 = vld [vmem:[%s1] sm:$0x1]
  %v48 = vlaneseq
  %v49 = vshrl.u32 %v48, 7
  %v50 = vsub.s32 0, %v49
  %v51 = vrot.slane %v46, %v50
  %v53 = vmul.f32 %v30, %v51
  %v54 = vmul.f32 %v31, %v51
  %v55 = vmul.f32 %v32, %v51
  %v56 = vmul.f32 %v33, %v51
  %v57 = vmul.f32 %v34, %v51
  %v58 = vmul.f32 %v35, %v51
  %v59 = vmul.f32 %v36, %v51
  %v60 = vmul.f32 %v37, %v51
  %v61 = vmul.f32 %v38, %v51
  %v62 = vmul.f32 %v39, %v51
  %v63 = vmul.f32 %v40, %v51
  %v64 = vmul.f32 %v41, %v51
  %v65 = vmul.f32 %v42, %v51
  %v66 = vmul.f32 %v43, %v51
  %v67 = vmul.f32 %v44, %v51
  %v68 = vmul.f32 %v45, %v51
  %v69 = vld [vmem:[%s2] sm:$0x1]
  %v71 = vlaneseq
  %v72 = vshrl.u32 %v71, 7
  %v73 = vsub.s32 0, %v72
  %v74 = vrot.slane %v69, %v73
  %v76 = vadd.f32 %v53, %v74
  %v77 = vadd.f32 %v54, %v74
  %v78 = vadd.f32 %v55, %v74
  %v79 = vadd.f32 %v56, %v74
  %v80 = vadd.f32 %v57, %v74
  %v81 = vadd.f32 %v58, %v74
  %v82 = vadd.f32 %v59, %v74
  %v83 = vadd.f32 %v60, %v74
  %v84 = vadd.f32 %v61, %v74
  %v85 = vadd.f32 %v62, %v74
  %v86 = vadd.f32 %v63, %v74
  %v87 = vadd.f32 %v64, %v74
  %v88 = vadd.f32 %v65, %v74
  %v89 = vadd.f32 %v66, %v74
  %v90 = vadd.f32 %v67, %v74
  %v91 = vadd.f32 %v68, %v74
  %vm92 = vcmp.ge.f32.partialorder %v76, 0.0
  %vm93 = vcmp.ge.f32.partialorder %v77, 0.0
  %vm94 = vcmp.ge.f32.partialorder %v78, 0.0
  %vm95 = vcmp.ge.f32.partialorder %v79, 0.0
  %vm96 = vcmp.ge.f32.partialorder %v80, 0.0
  %vm97 = vcmp.ge.f32.partialorder %v81, 0.0
  %vm98 = vcmp.ge.f32.partialorder %v82, 0.0
  %vm99 = vcmp.ge.f32.partialorder %v83, 0.0
  %vm100 = vcmp.ge.f32.partialorder %v84, 0.0
  %vm101 = vcmp.ge.f32.partialorder %v85, 0.0
  %vm102 = vcmp.ge.f32.partialorder %v86, 0.0
  %vm103 = vcmp.ge.f32.partialorder %v87, 0.0
  %vm104 = vcmp.ge.f32.partialorder %v88, 0.0
  %vm105 = vcmp.ge.f32.partialorder %v89, 0.0
  %vm106 = vcmp.ge.f32.partialorder %v90, 0.0
  %vm107 = vcmp.ge.f32.partialorder %v91, 0.0
  %v108 = vmul.f32 %v76, 0.01
  %v109 = vmul.f32 %v77, 0.01
  %v110 = vmul.f32 %v78, 0.01
  %v111 = vmul.f32 %v79, 0.01
  %v112 = vmul.f32 %v80, 0.01
  %v113 = vmul.f32 %v81, 0.01
  %v114 = vmul.f32 %v82, 0.01
  %v115 = vmul.f32 %v83, 0.01
  %v116 = vmul.f32 %v84, 0.01
  %v117 = vmul.f32 %v85, 0.01
  %v118 = vmul.f32 %v86, 0.01
  %v119 = vmul.f32 %v87, 0.01
  %v120 = vmul.f32 %v88, 0.01
  %v121 = vmul.f32 %v89, 0.01
  %v122 = vmul.f32 %v90, 0.01
  %v123 = vmul.f32 %v91, 0.01
  %v124 = vsel %vm92, %v76, %v108
  %v125 = vsel %vm93, %v77, %v109
  %v126 = vsel %vm94, %v78, %v110
  %v127 = vsel %vm95, %v79, %v111
  %v128 = vsel %vm96, %v80, %v112
  %v129 = vsel %vm97, %v81, %v113
  %v130 = vsel %vm98, %v82, %v114
  %v131 = vsel %vm99, %v83, %v115
  %v132 = vsel %vm100, %v84, %v116
  %v133 = vsel %vm101, %v85, %v117
  %v134 = vsel %vm102, %v86, %v118
  %v135 = vsel %vm103, %v87, %v119
  %v136 = vsel %vm104, %v88, %v120
  %v137 = vsel %vm105, %v89, %v121
  %v138 = vsel %vm106, %v90, %v122
  %v139 = vsel %vm107, %v91, %v123
  %v140 = vpack.c.bf16 %v125, %v124
  %v141 = vpack.c.bf16 %v127, %v126
  %v142 = vpack.c.bf16 %v129, %v128
  %v143 = vpack.c.bf16 %v131, %v130
  %v144 = vpack.c.bf16 %v133, %v132
  %v145 = vpack.c.bf16 %v135, %v134
  %v146 = vpack.c.bf16 %v137, %v136
  %v147 = vpack.c.bf16 %v139, %v138
  %v156 = vunpack.c.l.b16 %v140
  %v157 = vunpack.c.h.b16 %v140
  %v158 = vunpack.c.l.b16 %v141
  %v159 = vunpack.c.h.b16 %v141
  %v160 = vunpack.c.l.b16 %v142
  %v161 = vunpack.c.h.b16 %v142
  %v162 = vunpack.c.l.b16 %v143
  %v163 = vunpack.c.h.b16 %v143
  %v164 = vunpack.c.l.b16 %v144
  %v165 = vunpack.c.h.b16 %v144
  %v166 = vunpack.c.l.b16 %v145
  %v167 = vunpack.c.h.b16 %v145
  %v168 = vunpack.c.l.b16 %v146
  %v169 = vunpack.c.h.b16 %v146
  %v170 = vunpack.c.l.b16 %v147
  %v171 = vunpack.c.h.b16 %v147
  %v172 = vpack.c.b16 %v156, %v156
  %v173 = vpack.c.b16 %v157, %v157
  %v174 = vpack.c.b16 %v158, %v158
  %v175 = vpack.c.b16 %v159, %v159
  %v176 = vpack.c.b16 %v160, %v160
  %v177 = vpack.c.b16 %v161, %v161
  %v178 = vpack.c.b16 %v162, %v162
  %v179 = vpack.c.b16 %v163, %v163
  %v180 = vpack.c.b16 %v164, %v164
  %v181 = vpack.c.b16 %v165, %v165
  %v182 = vpack.c.b16 %v166, %v166
  %v183 = vpack.c.b16 %v167, %v167
  %v184 = vpack.c.b16 %v168, %v168
  %v185 = vpack.c.b16 %v169, %v169
  %v186 = vpack.c.b16 %v170, %v170
  %v187 = vpack.c.b16 %v171, %v171
  %204 = vst [vmem:[%s3] sm:$0xf] %v172
  %205 = vst [vmem:[%s3 + $0x4] sm:$0xf] %v173
  %206 = vst [vmem:[%s3 + $0x8] sm:$0xf] %v174
  %207 = vst [vmem:[%s3 + $0xc] sm:$0xf] %v175
  %208 = vst [vmem:[%s3 + $0x10] sm:$0xf] %v176
  %209 = vst [vmem:[%s3 + $0x14] sm:$0xf] %v177
  %210 = vst [vmem:[%s3 + $0x18] sm:$0xf] %v178
  %211 = vst [vmem:[%s3 + $0x1c] sm:$0xf] %v179
  %212 = vst [vmem:[%s3 + $0x20] sm:$0xf] %v180
  %213 = vst [vmem:[%s3 + $0x24] sm:$0xf] %v181
  %214 = vst [vmem:[%s3 + $0x28] sm:$0xf] %v182
  %215 = vst [vmem:[%s3 + $0x2c] sm:$0xf] %v183
  %216 = vst [vmem:[%s3 + $0x30] sm:$0xf] %v184
  %217 = vst [vmem:[%s3 + $0x34] sm:$0xf] %v185
  %218 = vst [vmem:[%s3 + $0x38] sm:$0xf] %v186
  %219 = vst [vmem:[%s3 + $0x3c] sm:$0xf] %v187
  // Predicated region
  $region14: #{ae_forward.10} parent=0 // pred_check
    _
  $region15: #{ae_forward.10} parent=0 // pred_check_branch
    %221 = sbr.rel (0) target = $region17
  $region16: #{ae_forward.10} parent=0 // pred_region
    _
  $region17: #{ae_forward.10} parent=0 // pred_fallthru
    _
  // Predicated region
  $region18: #{ae_forward.10} parent=0 // pred_check
    _
  $region19: #{ae_forward.10} parent=0 // pred_check_branch
    %223 = sbr.rel (0) target = $region21
  $region20: #{ae_forward.10} parent=0 // pred_region
    _
  $region21: #{ae_forward.10} parent=0 // pred_fallthru
    _

// kernel: ae_forward.9
$region0: #{ae_forward.9}
  #allocation0 [shape = 'u32[]', space=smem, size = 0x4, offset = 0x4, fixed_abs, tag = 'smem constant byte address 0x4 - core index']
  #allocation1 [shape = 'u32[144,128]{1,0:T(1,128)}', space=vmem, size = 0x12000, scoped, tag = 'internal scratch']
  %s0 = inlined_call_operand.vmem [shape: bf16[128,36], index: 0, kind: input, shape index: {}]
  %s1 = inlined_call_operand.vmem [shape: bf16[36,128], index: 1, kind: input, shape index: {}]
  %s2 = inlined_call_operand.vmem [shape: bf16[128,128], index: 2, kind: output, shape index: {0}]
  %s3 = inlined_call_operand.vmem [shape: f32[8,128], index: 3, kind: output, shape index: {1}]
  %4 = xla_tuple %s2, %s3
  %s5 = sld [smem:[#allocation0]]
  $region26: #{ae_forward.9} parent=0
    _
  %s7 = ssub.s32 1, %s5
  %s8 = scalar_select 0, %s7, %s5
  // Predicated region
  $region2: #{ae_forward.9} parent=0 // pred_check
    _
  $region3: #{ae_forward.9} parent=0 // pred_check_branch
    %10 = sbr.rel (0) target = $region5
  $region4: #{ae_forward.9} parent=0 // pred_region
    _
  $region5: #{ae_forward.9} parent=0 // pred_fallthru
    _
  // Predicated region
  $region6: #{ae_forward.9} parent=0 // pred_check
    _
  $region7: #{ae_forward.9} parent=0 // pred_check_branch
    %12 = sbr.rel (0) target = $region9
  $region8: #{ae_forward.9} parent=0 // pred_region
    _
  $region9: #{ae_forward.9} parent=0 // pred_fallthru
    _
  %v14 = vld [vmem:[%s0] sm:$0xf]
  %v15 = vld [vmem:[%s0 + $0x4] sm:$0xf]
  %v16 = vld [vmem:[%s0 + $0x8] sm:$0xf]
  %v17 = vld [vmem:[%s0 + $0xc] sm:$0xf]
  %v18 = vld [vmem:[%s0 + $0x10] sm:$0xf]
  %v19 = vld [vmem:[%s0 + $0x14] sm:$0xf]
  %v20 = vld [vmem:[%s0 + $0x18] sm:$0xf]
  %v21 = vld [vmem:[%s0 + $0x1c] sm:$0xf]
  %v22 = vld [vmem:[%s0 + $0x20] sm:$0xf]
  %v23 = vld [vmem:[%s0 + $0x24] sm:$0xf]
  %v24 = vld [vmem:[%s0 + $0x28] sm:$0xf]
  %v25 = vld [vmem:[%s0 + $0x2c] sm:$0xf]
  %v26 = vld [vmem:[%s0 + $0x30] sm:$0xf]
  %v27 = vld [vmem:[%s0 + $0x34] sm:$0xf]
  %v28 = vld [vmem:[%s0 + $0x38] sm:$0xf]
  %v29 = vld [vmem:[%s0 + $0x3c] sm:$0xf]
  %v30 = vld [vmem:[%s1] sm:$0xf]
  %v31 = vld [vmem:[%s1 + $0x4] sm:$0xf]
  %v32 = vld [vmem:[%s1 + $0x8] sm:$0xf]
  %v33 = vld [vmem:[%s1 + $0xc] sm:$0xf]
  %v34 = vld [vmem:[%s1 + $0x10] sm:$0x3]
  %v51 = vunpack.c.l.b16 %v14
  %v52 = vunpack.c.l.b16 %v15
  %v53 = vunpack.c.l.b16 %v16
  %v54 = vunpack.c.l.b16 %v17
  %v55 = vunpack.c.l.b16 %v18
  %v56 = vunpack.c.l.b16 %v19
  %v57 = vunpack.c.l.b16 %v20
  %v58 = vunpack.c.l.b16 %v21
  %v59 = vunpack.c.l.b16 %v22
  %v60 = vunpack.c.l.b16 %v23
  %v61 = vunpack.c.l.b16 %v24
  %v62 = vunpack.c.l.b16 %v25
  %v63 = vunpack.c.l.b16 %v26
  %v64 = vunpack.c.l.b16 %v27
  %v65 = vunpack.c.l.b16 %v28
  %v66 = vunpack.c.l.b16 %v29
  %v67 = vpack.c.b16 %v52, %v51
  %v68 = vpack.c.b16 %v54, %v53
  %v69 = vpack.c.b16 %v56, %v55
  %v70 = vpack.c.b16 %v58, %v57
  %v71 = vpack.c.b16 %v60, %v59
  %v72 = vpack.c.b16 %v62, %v61
  %v73 = vpack.c.b16 %v64, %v63
  %v74 = vpack.c.b16 %v66, %v65
  %v80 = vunpack.c.l.b16 %v30
  %v81 = vunpack.c.l.b16 %v31
  %v82 = vunpack.c.l.b16 %v32
  %v83 = vunpack.c.l.b16 %v33
  %v84 = vunpack.c.l.b16 %v34
  %v85 = vpack.c.b16 %v81, %v80
  %v86 = vpack.c.b16 %v83, %v82
  %v87 = vpack.c.b16 %v84, %v84
  %vm90 = vcmask 293888
  %v92 = vsel %vm90, %v67, 0
  %v95 = vsel %vm90, %v68, 0
  %v98 = vsel %vm90, %v69, 0
  %v101 = vsel %vm90, %v70, 0
  %v104 = vsel %vm90, %v71, 0
  %v107 = vsel %vm90, %v72, 0
  %v110 = vsel %vm90, %v73, 0
  %v113 = vsel %vm90, %v74, 0
  %vm115 = vcmask 1041408
  %v117 = vsel %vm115, %v87, 0
  %119 = vmatprep.subr.bf16.mxu0 0
  %120 = vmatpush1.bf16.msra.mxu0 %v85
  %121 = vmatprep.subr.bf16.mxu0 0
  %122 = vmatpush1.bf16.msra.mxu0 %v86
  %123 = vmatprep.subr.bf16.mxu0 0
  %124 = vmatpush1.bf16.msra.mxu0 %v117
  %125 = vmatprep.subr.bf16.mxu0 0
  %126 = vmatpush1.bf16.msra.mxu0 0
  %127 = vmatprep.subr.bf16.mxu0 0
  %128 = vmatpush1.bf16.msra.mxu0 0
  %129 = vmatprep.subr.bf16.mxu0 0
  %130 = vmatpush1.bf16.msra.mxu0 0
  %131 = vmatprep.subr.bf16.mxu0 0
  %132 = vmatpush1.bf16.msra.mxu0 0
  %133 = vmatprep.subr.bf16.mxu0 0
  %134 = vmatpush1.bf16.msra.mxu0 0
  %135 = vmatprep.subr.bf16.mxu0 0
  %136 = vmatpush1.bf16.msra.mxu0 0
  %137 = vmatprep.subr.bf16.mxu0 0
  %138 = vmatpush1.bf16.msra.mxu0 0
  %139 = vmatprep.subr.bf16.mxu0 0
  %140 = vmatpush1.bf16.msra.mxu0 0
  %141 = vmatprep.subr.bf16.mxu0 0
  %142 = vmatpush1.bf16.msra.mxu0 0
  %143 = vmatprep.subr.bf16.mxu0 0
  %144 = vmatpush1.bf16.msra.mxu0 0
  %145 = vmatprep.subr.bf16.mxu0 0
  %146 = vmatpush1.bf16.msra.mxu0 0
  %147 = vmatprep.subr.bf16.mxu0 0
  %148 = vmatpush1.bf16.msra.mxu0 0
  %149 = vmatprep.subr.bf16.mxu0 0
  %150 = vmatpush1.bf16.msra.mxu0 0
  %151 = vmatprep.mubr.bf16.mxu0 0
  %152 = vmatmul.mubr.bf16.gmra.mrb[0].mxu0 %v92
  %v153 = vpop.f32.mrb[0].mxu0
  %v154 = vadd.f32 0.0, %v153
  %v155 = vpop.f32.mrb[0].mxu0
  %v156 = vpop.f32.mrb[0].mxu0
  %v157 = vadd.f32 0.0, %v156
  %v158 = vpop.f32.mrb[0].mxu0
  %159 = vmatprep.mubr.bf16.mxu0 0
  %160 = vmatmul.mubr.bf16.gmra.mrb[0].mxu0 %v95
  %v161 = vpop.f32.mrb[0].mxu0
  %v162 = vadd.f32 0.0, %v161
  %v163 = vpop.f32.mrb[0].mxu0
  %v164 = vpop.f32.mrb[0].mxu0
  %v165 = vadd.f32 0.0, %v164
  %v166 = vpop.f32.mrb[0].mxu0
  %167 = vmatprep.mubr.bf16.mxu0 0
  %168 = vmatmul.mubr.bf16.gmra.mrb[0].mxu0 %v98
  %v169 = vpop.f32.mrb[0].mxu0
  %v170 = vadd.f32 0.0, %v169
  %v171 = vpop.f32.mrb[0].mxu0
  %v172 = vpop.f32.mrb[0].mxu0
  %v173 = vadd.f32 0.0, %v172
  %v174 = vpop.f32.mrb[0].mxu0
  %175 = vmatprep.mubr.bf16.mxu0 0
  %176 = vmatmul.mubr.bf16.gmra.mrb[0].mxu0 %v101
  %v177 = vpop.f32.mrb[0].mxu0
  %v178 = vadd.f32 0.0, %v177
  %v179 = vpop.f32.mrb[0].mxu0
  %v180 = vpop.f32.mrb[0].mxu0
  %v181 = vadd.f32 0.0, %v180
  %v182 = vpop.f32.mrb[0].mxu0
  %183 = vmatprep.mubr.bf16.mxu0 0
  %184 = vmatmul.mubr.bf16.gmra.mrb[0].mxu0 %v104
  %v185 = vpop.f32.mrb[0].mxu0
  %v186 = vadd.f32 0.0, %v185
  %v187 = vpop.f32.mrb[0].mxu0
  %v188 = vpop.f32.mrb[0].mxu0
  %v189 = vadd.f32 0.0, %v188
  %v190 = vpop.f32.mrb[0].mxu0
  %191 = vmatprep.mubr.bf16.mxu0 0
  %192 = vmatmul.mubr.bf16.gmra.mrb[0].mxu0 %v107
  %v193 = vpop.f32.mrb[0].mxu0
  %v194 = vadd.f32 0.0, %v193
  %v195 = vpop.f32.mrb[0].mxu0
  %v196 = vpop.f32.mrb[0].mxu0
  %v197 = vadd.f32 0.0, %v196
  %v198 = vpop.f32.mrb[0].mxu0
  %199 = vmatprep.mubr.bf16.mxu0 0
  %200 = vmatmul.mubr.bf16.gmra.mrb[0].mxu0 %v110
  %v201 = vpop.f32.mrb[0].mxu0
  %v202 = vadd.f32 0.0, %v201
  %v203 = vpop.f32.mrb[0].mxu0
  %v204 = vpop.f32.mrb[0].mxu0
  %v205 = vadd.f32 0.0, %v204
  %v206 = vpop.f32.mrb[0].mxu0
  %207 = vmatprep.mubr.bf16.mxu0 0
  %208 = vmatmul.mubr.bf16.gmra.mrb[0].mxu0 %v113
  %v209 = vpop.f32.mrb[0].mxu0
  %v210 = vadd.f32 0.0, %v209
  %v211 = vpop.f32.mrb[0].mxu0
  %v212 = vpop.f32.mrb[0].mxu0
  %v213 = vadd.f32 0.0, %v212
  %v214 = vpop.f32.mrb[0].mxu0
  %215 = vdwg.mxu0
  %v216 = vpack.c.bf16 %v157, %v154
  %v217 = vpack.c.bf16 %v165, %v162
  %v218 = vpack.c.bf16 %v173, %v170
  %v219 = vpack.c.bf16 %v181, %v178
  %v220 = vpack.c.bf16 %v189, %v186
  %v221 = vpack.c.bf16 %v197, %v194
  %v222 = vpack.c.bf16 %v205, %v202
  %v223 = vpack.c.bf16 %v213, %v210
  %v232 = vunpack.c.l.b16 %v216
  %v233 = vunpack.c.h.b16 %v216
  %v234 = vunpack.c.l.b16 %v217
  %v235 = vunpack.c.h.b16 %v217
  %v236 = vunpack.c.l.b16 %v218
  %v237 = vunpack.c.h.b16 %v218
  %v238 = vunpack.c.l.b16 %v219
  %v239 = vunpack.c.h.b16 %v219
  %v240 = vunpack.c.l.b16 %v220
  %v241 = vunpack.c.h.b16 %v220
  %v242 = vunpack.c.l.b16 %v221
  %v243 = vunpack.c.h.b16 %v221
  %v244 = vunpack.c.l.b16 %v222
  %v245 = vunpack.c.h.b16 %v222
  %v246 = vunpack.c.l.b16 %v223
  %v247 = vunpack.c.h.b16 %v223
  %v248 = vpack.c.b16 %v232, %v232
  %v249 = vpack.c.b16 %v233, %v233
  %v250 = vpack.c.b16 %v234, %v234
  %v251 = vpack.c.b16 %v235, %v235
  %v252 = vpack.c.b16 %v236, %v236
  %v253 = vpack.c.b16 %v237, %v237
  %v254 = vpack.c.b16 %v238, %v238
  %v255 = vpack.c.b16 %v239, %v239
  %v256 = vpack.c.b16 %v240, %v240
  %v257 = vpack.c.b16 %v241, %v241
  %v258 = vpack.c.b16 %v242, %v242
  %v259 = vpack.c.b16 %v243, %v243
  %v260 = vpack.c.b16 %v244, %v244
  %v261 = vpack.c.b16 %v245, %v245
  %v262 = vpack.c.b16 %v246, %v246
  %v263 = vpack.c.b16 %v247, %v247
  %280 = vst [vmem:[%s2] sm:$0xf] %v248
  %281 = vst [vmem:[%s2 + $0x4] sm:$0xf] %v249
  %282 = vst [vmem:[%s2 + $0x8] sm:$0xf] %v250
  %283 = vst [vmem:[%s2 + $0xc] sm:$0xf] %v251
  %284 = vst [vmem:[%s2 + $0x10] sm:$0xf] %v252
  %285 = vst [vmem:[%s2 + $0x14] sm:$0xf] %v253
  %286 = vst [vmem:[%s2 + $0x18] sm:$0xf] %v254
  %287 = vst [vmem:[%s2 + $0x1c] sm:$0xf] %v255
  %288 = vst [vmem:[%s2 + $0x20] sm:$0xf] %v256
  %289 = vst [vmem:[%s2 + $0x24] sm:$0xf] %v257
  %290 = vst [vmem:[%s2 + $0x28] sm:$0xf] %v258
  %291 = vst [vmem:[%s2 + $0x2c] sm:$0xf] %v259
  %292 = vst [vmem:[%s2 + $0x30] sm:$0xf] %v260
  %293 = vst [vmem:[%s2 + $0x34] sm:$0xf] %v261
  %294 = vst [vmem:[%s2 + $0x38] sm:$0xf] %v262
  %295 = vst [vmem:[%s2 + $0x3c] sm:$0xf] %v263
  %v296 = vadd.f32 %v154, %v157
  %v297 = vadd.f32 %v296, %v162
  %v298 = vadd.f32 %v297, %v165
  %v299 = vadd.f32 %v298, %v170
  %v300 = vadd.f32 %v299, %v173
  %v301 = vadd.f32 %v300, %v178
  %v302 = vadd.f32 %v301, %v181
  %v303 = vadd.f32 %v302, %v186
  %v304 = vadd.f32 %v303, %v189
  %v305 = vadd.f32 %v304, %v194
  %v306 = vadd.f32 %v305, %v197
  %v307 = vadd.f32 %v306, %v202
  %v308 = vadd.f32 %v307, %v205
  %v309 = vadd.f32 %v308, %v210
  %v310 = vadd.f32 %v309, %v213
  %v311 = vrot.slane %v310, 4
  %v312 = vadd.f32 %v310, %v311
  %v313 = vrot.slane %v312, 2
  %v314 = vadd.f32 %v312, %v313
  %v315 = vrot.slane %v314, 1
  %v316 = vadd.f32 %v314, %v315
  %v317 = vmul.f32 %v154, %v154
  %v318 = vmul.f32 %v157, %v157
  %v319 = vmul.f32 %v162, %v162
  %v320 = vmul.f32 %v165, %v165
  %v321 = vmul.f32 %v170, %v170
  %v322 = vmul.f32 %v173, %v173
  %v323 = vmul.f32 %v178, %v178
  %v324 = vmul.f32 %v181, %v181
  %v325 = vmul.f32 %v186, %v186
  %v326 = vmul.f32 %v189, %v189
  %v327 = vmul.f32 %v194, %v194
  %v328 = vmul.f32 %v197, %v197
  %v329 = vmul.f32 %v202, %v202
  %v330 = vmul.f32 %v205, %v205
  %v331 = vmul.f32 %v210, %v210
  %v332 = vmul.f32 %v213, %v213
  %v333 = vadd.f32 %v317, %v318
  %v334 = vadd.f32 %v333, %v319
  %v335 = vadd.f32 %v334, %v320
  %v336 = vadd.f32 %v335, %v321
  %v337 = vadd.f32 %v336, %v322
  %v338 = vadd.f32 %v337, %v323
  %v339 = vadd.f32 %v338, %v324
  %v340 = vadd.f32 %v339, %v325
  %v341 = vadd.f32 %v340, %v326
  %v342 = vadd.f32 %v341, %v327
  %v343 = vadd.f32 %v342, %v328
  %v344 = vadd.f32 %v343, %v329
  %v345 = vadd.f32 %v344, %v330
  %v346 = vadd.f32 %v345, %v331
  %v347 = vadd.f32 %v346, %v332
  %v348 = vrot.slane %v347, 4
  %v349 = vadd.f32 %v347, %v348
  %v350 = vrot.slane %v349, 2
  %v351 = vadd.f32 %v349, %v350
  %v352 = vrot.slane %v351, 1
  %v353 = vadd.f32 %v351, %v352
  %v354 = vlaneseq
  %v355 = vshrl.u32 %v354, 7
  %vm356 = vcmp.eq.s32.totalorder %v355, 0
  %vm357 = vcmp.eq.s32.totalorder %v355, 1
  %v358 = vsel %vm357, %v353, 0.0
  %v359 = vsel %vm356, %v316, %v358
  %360 = vst [vmem:[%s3] sm:$0xff] %v359
  // Predicated region
  $region10: #{ae_forward.9} parent=0 // pred_check
    _
  $region11: #{ae_forward.9} parent=0 // pred_check_branch
    %362 = sbr.rel (0) target = $region13
  $region12: #{ae_forward.9} parent=0 // pred_region
    _
  $region13: #{ae_forward.9} parent=0 // pred_fallthru
    _
  // Predicated region
  $region14: #{ae_forward.9} parent=0 // pred_check
    _
  $region15: #{ae_forward.9} parent=0 // pred_check_branch
    %364 = sbr.rel (0) target = $region17
  $region16: #{ae_forward.9} parent=0 // pred_region
    _
  $region17: #{ae_forward.9} parent=0 // pred_fallthru
    _
  // Predicated region
  $region18: #{ae_forward.9} parent=0 // pred_check
    _
  $region19: #{ae_forward.9} parent=0 // pred_check_branch
    %366 = sbr.rel (0) target = $region21
  $region20: #{ae_forward.9} parent=0 // pred_region
    _
  $region21: #{ae_forward.9} parent=0 // pred_fallthru
    _
  // Predicated region
  $region22: #{ae_forward.9} parent=0 // pred_check
    _
  $region23: #{ae_forward.9} parent=0 // pred_check_branch
    %368 = sbr.rel (0) target = $region25
  $region24: #{ae_forward.9} parent=0 // pred_region
    _
  $region25: #{ae_forward.9} parent=0 // pred_fallthru
    _

// kernel: ae_forward.11
$region0: #{ae_forward.11}
  #allocation0 [shape = 'u32[]', space=smem, size = 0x4, offset = 0x4, fixed_abs, tag = 'smem constant byte address 0x4 - core index']
  #allocation1 [shape = 'u32[144,128]{1,0:T(1,128)}', space=vmem, size = 0x12000, scoped, tag = 'internal scratch']
  %s0 = inlined_call_operand.vmem [shape: bf16[32,72], index: 0, kind: input, shape index: {}]
  %s1 = inlined_call_operand.vmem [shape: bf16[72,128], index: 1, kind: input, shape index: {}]
  %s2 = inlined_call_operand.vmem [shape: bf16[32,128], index: 2, kind: output, shape index: {0}]
  %s3 = inlined_call_operand.vmem [shape: f32[8,128], index: 3, kind: output, shape index: {1}]
  %4 = xla_tuple %s2, %s3
  %s5 = sld [smem:[#allocation0]]
  $region26: #{ae_forward.11} parent=0
    _
  %s7 = ssub.s32 1, %s5
  %s8 = scalar_select 0, %s7, %s5
  // Predicated region
  $region2: #{ae_forward.11} parent=0 // pred_check
    _
  $region3: #{ae_forward.11} parent=0 // pred_check_branch
    %10 = sbr.rel (0) target = $region5
  $region4: #{ae_forward.11} parent=0 // pred_region
    _
  $region5: #{ae_forward.11} parent=0 // pred_fallthru
    _
  // Predicated region
  $region6: #{ae_forward.11} parent=0 // pred_check
    _
  $region7: #{ae_forward.11} parent=0 // pred_check_branch
    %12 = sbr.rel (0) target = $region9
  $region8: #{ae_forward.11} parent=0 // pred_region
    _
  $region9: #{ae_forward.11} parent=0 // pred_fallthru
    _
  %v14 = vld [vmem:[%s0] sm:$0xf]
  %v15 = vld [vmem:[%s0 + $0x4] sm:$0xf]
  %v16 = vld [vmem:[%s0 + $0x8] sm:$0xf]
  %v17 = vld [vmem:[%s0 + $0xc] sm:$0xf]
  %v18 = vld [vmem:[%s1] sm:$0xf]
  %v19 = vld [vmem:[%s1 + $0x4] sm:$0xf]
  %v20 = vld [vmem:[%s1 + $0x8] sm:$0xf]
  %v21 = vld [vmem:[%s1 + $0xc] sm:$0xf]
  %v22 = vld [vmem:[%s1 + $0x10] sm:$0xf]
  %v23 = vld [vmem:[%s1 + $0x14] sm:$0xf]
  %v24 = vld [vmem:[%s1 + $0x18] sm:$0xf]
  %v25 = vld [vmem:[%s1 + $0x1c] sm:$0xf]
  %v26 = vld [vmem:[%s1 + $0x20] sm:$0xf]
  %v31 = vunpack.c.l.b16 %v14
  %v32 = vunpack.c.l.b16 %v15
  %v33 = vunpack.c.l.b16 %v16
  %v34 = vunpack.c.l.b16 %v17
  %v35 = vpack.c.b16 %v32, %v31
  %v36 = vpack.c.b16 %v34, %v33
  %v46 = vunpack.c.l.b16 %v18
  %v47 = vunpack.c.l.b16 %v19
  %v48 = vunpack.c.l.b16 %v20
  %v49 = vunpack.c.l.b16 %v21
  %v50 = vunpack.c.l.b16 %v22
  %v51 = vunpack.c.l.b16 %v23
  %v52 = vunpack.c.l.b16 %v24
  %v53 = vunpack.c.l.b16 %v25
  %v54 = vunpack.c.l.b16 %v26
  %v55 = vpack.c.b16 %v47, %v46
  %v56 = vpack.c.b16 %v49, %v48
  %v57 = vpack.c.b16 %v51, %v50
  %v58 = vpack.c.b16 %v53, %v52
  %v59 = vpack.c.b16 %v54, %v54
  %vm64 = vcmask 588800
  %v66 = vsel %vm64, %v35, 0
  %v69 = vsel %vm64, %v36, 0
  %vm71 = vcmask 1043456
  %v73 = vsel %vm71, %v59, 0
  %75 = vmatprep.subr.bf16.mxu0 0
  %76 = vmatpush1.bf16.msra.mxu0 %v55
  %77 = vmatprep.subr.bf16.mxu0 0
  %78 = vmatpush1.bf16.msra.mxu0 %v56
  %79 = vmatprep.subr.bf16.mxu0 0
  %80 = vmatpush1.bf16.msra.mxu0 %v57
  %81 = vmatprep.subr.bf16.mxu0 0
  %82 = vmatpush1.bf16.msra.mxu0 %v58
  %83 = vmatprep.subr.bf16.mxu0 0
  %84 = vmatpush1.bf16.msra.mxu0 %v73
  %85 = vmatprep.subr.bf16.mxu0 0
  %86 = vmatpush1.bf16.msra.mxu0 0
  %87 = vmatprep.subr.bf16.mxu0 0
  %88 = vmatpush1.bf16.msra.mxu0 0
  %89 = vmatprep.subr.bf16.mxu0 0
  %90 = vmatpush1.bf16.msra.mxu0 0
  %91 = vmatprep.subr.bf16.mxu0 0
  %92 = vmatpush1.bf16.msra.mxu0 0
  %93 = vmatprep.subr.bf16.mxu0 0
  %94 = vmatpush1.bf16.msra.mxu0 0
  %95 = vmatprep.subr.bf16.mxu0 0
  %96 = vmatpush1.bf16.msra.mxu0 0
  %97 = vmatprep.subr.bf16.mxu0 0
  %98 = vmatpush1.bf16.msra.mxu0 0
  %99 = vmatprep.subr.bf16.mxu0 0
  %100 = vmatpush1.bf16.msra.mxu0 0
  %101 = vmatprep.subr.bf16.mxu0 0
  %102 = vmatpush1.bf16.msra.mxu0 0
  %103 = vmatprep.subr.bf16.mxu0 0
  %104 = vmatpush1.bf16.msra.mxu0 0
  %105 = vmatprep.subr.bf16.mxu0 0
  %106 = vmatpush1.bf16.msra.mxu0 0
  %107 = vmatprep.mubr.bf16.mxu0 0
  %108 = vmatmul.mubr.bf16.gmra.mrb[0].mxu0 %v66
  %v109 = vpop.f32.mrb[0].mxu0
  %v110 = vadd.f32 0.0, %v109
  %v111 = vpop.f32.mrb[0].mxu0
  %v112 = vpop.f32.mrb[0].mxu0
  %v113 = vadd.f32 0.0, %v112
  %v114 = vpop.f32.mrb[0].mxu0
  %115 = vmatprep.mubr.bf16.mxu0 0
  %116 = vmatmul.mubr.bf16.gmra.mrb[0].mxu0 %v69
  %v117 = vpop.f32.mrb[0].mxu0
  %v118 = vadd.f32 0.0, %v117
  %v119 = vpop.f32.mrb[0].mxu0
  %v120 = vpop.f32.mrb[0].mxu0
  %v121 = vadd.f32 0.0, %v120
  %v122 = vpop.f32.mrb[0].mxu0
  %123 = vdwg.mxu0
  %v124 = vpack.c.bf16 %v113, %v110
  %v125 = vpack.c.bf16 %v121, %v118
  %v128 = vunpack.c.l.b16 %v124
  %v129 = vunpack.c.h.b16 %v124
  %v130 = vunpack.c.l.b16 %v125
  %v131 = vunpack.c.h.b16 %v125
  %v132 = vpack.c.b16 %v128, %v128
  %v133 = vpack.c.b16 %v129, %v129
  %v134 = vpack.c.b16 %v130, %v130
  %v135 = vpack.c.b16 %v131, %v131
  %140 = vst [vmem:[%s2] sm:$0xf] %v132
  %141 = vst [vmem:[%s2 + $0x4] sm:$0xf] %v133
  %142 = vst [vmem:[%s2 + $0x8] sm:$0xf] %v134
  %143 = vst [vmem:[%s2 + $0xc] sm:$0xf] %v135
  %v144 = vadd.f32 %v110, %v113
  %v145 = vadd.f32 %v144, %v118
  %v146 = vadd.f32 %v145, %v121
  %v147 = vrot.slane %v146, 4
  %v148 = vadd.f32 %v146, %v147
  %v149 = vrot.slane %v148, 2
  %v150 = vadd.f32 %v148, %v149
  %v151 = vrot.slane %v150, 1
  %v152 = vadd.f32 %v150, %v151
  %v153 = vmul.f32 %v110, %v110
  %v154 = vmul.f32 %v113, %v113
  %v155 = vmul.f32 %v118, %v118
  %v156 = vmul.f32 %v121, %v121
  %v157 = vadd.f32 %v153, %v154
  %v158 = vadd.f32 %v157, %v155
  %v159 = vadd.f32 %v158, %v156
  %v160 = vrot.slane %v159, 4
  %v161 = vadd.f32 %v159, %v160
  %v162 = vrot.slane %v161, 2
  %v163 = vadd.f32 %v161, %v162
  %v164 = vrot.slane %v163, 1
  %v165 = vadd.f32 %v163, %v164
  %v166 = vlaneseq
  %v167 = vshrl.u32 %v166, 7
  %vm168 = vcmp.eq.s32.totalorder %v167, 0
  %vm169 = vcmp.eq.s32.totalorder %v167, 1
  %v170 = vsel %vm169, %v165, 0.0
  %v171 = vsel %vm168, %v152, %v170
  %172 = vst [vmem:[%s3] sm:$0xff] %v171
  // Predicated region
  $region10: #{ae_forward.11} parent=0 // pred_check
    _
  $region11: #{ae_forward.11} parent=0 // pred_check_branch
    %174 = sbr.rel (0) target = $region13
  $region12: #{ae_forward.11} parent=0 // pred_region
    _
  $region13: #{ae_forward.11} parent=0 // pred_fallthru
    _
  // Predicated region
  $region14: #{ae_forward.11} parent=0 // pred_check
    _
  $region15: #{ae_forward.11} parent=0 // pred_check_branch
    %176 = sbr.rel (0) target = $region17
  $region16: #{ae_forward.11} parent=0 // pred_region
    _
  $region17: #{ae_forward.11} parent=0 // pred_fallthru
    _
  // Predicated region
  $region18: #{ae_forward.11} parent=0 // pred_check
    _
  $region19: #{ae_forward.11} parent=0 // pred_check_branch
    %178 = sbr.rel (0) target = $region21
  $region20: #{ae_forward.11} parent=0 // pred_region
    _
  $region21: #{ae_forward.11} parent=0 // pred_fallthru
    _
  // Predicated region
  $region22: #{ae_forward.11} parent=0 // pred_check
    _
  $region23: #{ae_forward.11} parent=0 // pred_check_branch
    %180 = sbr.rel (0) target = $region25
  $region24: #{ae_forward.11} parent=0 // pred_region
    _
  $region25: #{ae_forward.11} parent=0 // pred_fallthru
    _

// kernel: ae_forward.12
$region0: #{ae_forward.12}
  #allocation0 [shape = 'u32[]', space=smem, size = 0x4, offset = 0x4, fixed_abs, tag = 'smem constant byte address 0x4 - core index']
  #allocation1 [shape = 'u32[144,128]{1,0:T(1,128)}', space=vmem, size = 0x12000, scoped, tag = 'internal scratch']
  %s0 = inlined_call_operand.vmem [shape: bf16[32,128], index: 0, kind: input, shape index: {}]
  %s1 = inlined_call_operand.vmem [shape: f32[1,128], index: 1, kind: input, shape index: {}]
  %s2 = inlined_call_operand.vmem [shape: f32[1,128], index: 2, kind: input, shape index: {}]
  %s3 = inlined_call_operand.vmem [shape: bf16[32,128], index: 3, kind: output, shape index: {}]
  %s4 = sld [smem:[#allocation0]]
  $region22: #{ae_forward.12} parent=0
    _
  %s6 = ssub.s32 1, %s4
  %s7 = scalar_select 0, %s6, %s4
  // Predicated region
  $region2: #{ae_forward.12} parent=0 // pred_check
    _
  $region3: #{ae_forward.12} parent=0 // pred_check_branch
    %9 = sbr.rel (0) target = $region5
  $region4: #{ae_forward.12} parent=0 // pred_region
    _
  $region5: #{ae_forward.12} parent=0 // pred_fallthru
    _
  // Predicated region
  $region6: #{ae_forward.12} parent=0 // pred_check
    _
  $region7: #{ae_forward.12} parent=0 // pred_check_branch
    %11 = sbr.rel (0) target = $region9
  $region8: #{ae_forward.12} parent=0 // pred_region
    _
  $region9: #{ae_forward.12} parent=0 // pred_fallthru
    _
  // Predicated region
  $region10: #{ae_forward.12} parent=0 // pred_check
    _
  $region11: #{ae_forward.12} parent=0 // pred_check_branch
    %13 = sbr.rel (0) target = $region13
  $region12: #{ae_forward.12} parent=0 // pred_region
    _
  $region13: #{ae_forward.12} parent=0 // pred_fallthru
    _
  %v14 = vld [vmem:[%s0] sm:$0xf]
  %v15 = vld [vmem:[%s0 + $0x4] sm:$0xf]
  %v16 = vld [vmem:[%s0 + $0x8] sm:$0xf]
  %v17 = vld [vmem:[%s0 + $0xc] sm:$0xf]
  %v18 = vunpack.c.l.bf16 %v14
  %v19 = vunpack.c.l.bf16 %v15
  %v20 = vunpack.c.l.bf16 %v16
  %v21 = vunpack.c.l.bf16 %v17
  %v22 = vld [vmem:[%s1] sm:$0x1]
  %v24 = vlaneseq
  %v25 = vshrl.u32 %v24, 7
  %v26 = vsub.s32 0, %v25
  %v27 = vrot.slane %v22, %v26
  %v29 = vmul.f32 %v18, %v27
  %v30 = vmul.f32 %v19, %v27
  %v31 = vmul.f32 %v20, %v27
  %v32 = vmul.f32 %v21, %v27
  %v33 = vld [vmem:[%s2] sm:$0x1]
  %v35 = vlaneseq
  %v36 = vshrl.u32 %v35, 7
  %v37 = vsub.s32 0, %v36
  %v38 = vrot.slane %v33, %v37
  %v40 = vadd.f32 %v29, %v38
  %v41 = vadd.f32 %v30, %v38
  %v42 = vadd.f32 %v31, %v38
  %v43 = vadd.f32 %v32, %v38
  %vm44 = vcmp.ge.f32.partialorder %v40, 0.0
  %vm45 = vcmp.ge.f32.partialorder %v41, 0.0
  %vm46 = vcmp.ge.f32.partialorder %v42, 0.0
  %vm47 = vcmp.ge.f32.partialorder %v43, 0.0
  %v48 = vmul.f32 %v40, 0.01
  %v49 = vmul.f32 %v41, 0.01
  %v50 = vmul.f32 %v42, 0.01
  %v51 = vmul.f32 %v43, 0.01
  %v52 = vsel %vm44, %v40, %v48
  %v53 = vsel %vm45, %v41, %v49
  %v54 = vsel %vm46, %v42, %v50
  %v55 = vsel %vm47, %v43, %v51
  %v56 = vpack.c.bf16 %v53, %v52
  %v57 = vpack.c.bf16 %v55, %v54
  %v60 = vunpack.c.l.b16 %v56
  %v61 = vunpack.c.h.b16 %v56
  %v62 = vunpack.c.l.b16 %v57
  %v63 = vunpack.c.h.b16 %v57
  %v64 = vpack.c.b16 %v60, %v60
  %v65 = vpack.c.b16 %v61, %v61
  %v66 = vpack.c.b16 %v62, %v62
  %v67 = vpack.c.b16 %v63, %v63
  %72 = vst [vmem:[%s3] sm:$0xf] %v64
  %73 = vst [vmem:[%s3 + $0x4] sm:$0xf] %v65
  %74 = vst [vmem:[%s3 + $0x8] sm:$0xf] %v66
  %75 = vst [vmem:[%s3 + $0xc] sm:$0xf] %v67
  // Predicated region
  $region14: #{ae_forward.12} parent=0 // pred_check
    _
  $region15: #{ae_forward.12} parent=0 // pred_check_branch
    %77 = sbr.rel (0) target = $region17
  $region16: #{ae_forward.12} parent=0 // pred_region
    _
  $region17: #{ae_forward.12} parent=0 // pred_fallthru
    _
  // Predicated region
  $region18: #{ae_forward.12} parent=0 // pred_check
    _
  $region19: #{ae_forward.12} parent=0 // pred_check_branch
    %79 = sbr.rel (0) target = $region21
  $region20: #{ae_forward.12} parent=0 // pred_region
    _
  $region21: #{ae_forward.12} parent=0 // pred_fallthru
    _

// kernel: tile.28
$region0: #{tile.28}
  #allocation0 [shape = 's32[1]{0}', space=sflag, size = 0x4, scoped, tag = 'scoped memory for tile.28']
  %s0 = inlined_call_operand.vmem [shape: f32[8], index: 0, kind: input, shape index: {}]
  %s1 = inlined_call_operand.vmem [shape: f32[4,8], index: 1, kind: output, shape index: {}]
  // Predicated region
  $region2: #{tile.28} parent=0 // pred_check
    _
  $region3: #{tile.28} parent=0 // pred_check_branch
    %3 = sbr.rel (0) target = $region5
  $region4: #{tile.28} parent=0 // pred_region
    _
  $region5: #{tile.28} parent=0 // pred_fallthru
    _
  %v4 = vld [vmem:[%s0] ss:$0 sm:$0xff]
  %5 = vst [vmem:[%s1] sm:$0xf] %v4

// kernel: tile.29
$region0: #{tile.29}
  %s0 = inlined_call_operand.vmem [shape: f32[4,8], index: 0, kind: input, shape index: {}]
  %s1 = inlined_call_operand.vmem [shape: f32[32], index: 1, kind: output, shape index: {}]
  $region1: #{tile.29} parent=0
    #allocation0 [shape = 'u8[4096]{0}', space=vmem, size = 0x1000, scoped, tag = 'scoped mem for output reshape']
    #allocation1 [shape = 'u8[4096]{0}', space=vmem, size = 0x1000, scoped, tag = 'scoped mem for input reshape']
    %s3 = sshllo.u32 0, 4
    %v4 = vld [vmem:[%s0] sm:%s3]
    %5 = vst [vmem:[#allocation1] sm:%s3] %v4
    %v6 = vld [vmem:[#allocation1] sm:$0x1]
    %vm7 = vcmask 64512
    %8 = vst.msk [vmem:[#allocation0] sm:$0x1] %vm7, %v6
    %s9 = scalar_lea.vmem [#allocation1], 3
    %v10 = vld [vmem:[%s9] sm:$0x1]
    %11 = vrot.lane.b32.xlu0 %v10, 24
    %v12 = vpop.permute.xlu0 %11
    %vm13 = vcmask 261312
    %14 = vst.msk [vmem:[#allocation0] sm:$0x1] %vm13, %v12
    %s15 = scalar_lea.vmem [#allocation1], 2
    %v16 = vld [vmem:[%s15] sm:$0x1]
    %17 = vrot.lane.b32.xlu0 %v16, 16
    %v18 = vpop.permute.xlu0 %17
    %vm19 = vcmask 195712
    %20 = vst.msk [vmem:[#allocation0] sm:$0x1] %vm19, %v18
    %s21 = scalar_lea.vmem [#allocation1], 1
    %v22 = vld [vmem:[%s21] sm:$0x1]
    %23 = vrot.lane.b32.xlu0 %v22, 8
    %v24 = vpop.permute.xlu0 %23
    %vm25 = vcmask 130112
    %26 = vst.msk [vmem:[#allocation0] sm:$0x1] %vm25, %v24
    %s28 = sshllo.u32 0, 1
    %v30 = vld [vmem:[#allocation0] sm:%s28]
    %s31 = sshllo.u32 0, 1
    %32 = vst [vmem:[%s1] sm:%s31] %v30

// kernel: ae_forward.13
$region0: #{ae_forward.13}
  #allocation0 [shape = 'u32[]', space=smem, size = 0x4, offset = 0x4, fixed_abs, tag = 'smem constant byte address 0x4 - core index']
  #allocation1 [shape = 'u32[144,128]{1,0:T(1,128)}', space=vmem, size = 0x12000, scoped, tag = 'internal scratch']
  %s0 = inlined_call_operand.vmem [shape: bf16[32,64], index: 0, kind: input, shape index: {}]
  %s1 = inlined_call_operand.vmem [shape: bf16[64,128], index: 1, kind: input, shape index: {}]
  %s2 = inlined_call_operand.vmem [shape: bf16[32,128], index: 2, kind: output, shape index: {0}]
  %s3 = inlined_call_operand.vmem [shape: f32[8,128], index: 3, kind: output, shape index: {1}]
  %4 = xla_tuple %s2, %s3
  %s5 = sld [smem:[#allocation0]]
  $region26: #{ae_forward.13} parent=0
    _
  %s7 = ssub.s32 1, %s5
  %s8 = scalar_select 0, %s7, %s5
  // Predicated region
  $region2: #{ae_forward.13} parent=0 // pred_check
    _
  $region3: #{ae_forward.13} parent=0 // pred_check_branch
    %10 = sbr.rel (0) target = $region5
  $region4: #{ae_forward.13} parent=0 // pred_region
    _
  $region5: #{ae_forward.13} parent=0 // pred_fallthru
    _
  // Predicated region
  $region6: #{ae_forward.13} parent=0 // pred_check
    _
  $region7: #{ae_forward.13} parent=0 // pred_check_branch
    %12 = sbr.rel (0) target = $region9
  $region8: #{ae_forward.13} parent=0 // pred_region
    _
  $region9: #{ae_forward.13} parent=0 // pred_fallthru
    _
  %v14 = vld [vmem:[%s0] sm:$0xf]
  %v15 = vld [vmem:[%s0 + $0x4] sm:$0xf]
  %v16 = vld [vmem:[%s0 + $0x8] sm:$0xf]
  %v17 = vld [vmem:[%s0 + $0xc] sm:$0xf]
  %v18 = vld [vmem:[%s1] sm:$0xf]
  %v19 = vld [vmem:[%s1 + $0x4] sm:$0xf]
  %v20 = vld [vmem:[%s1 + $0x8] sm:$0xf]
  %v21 = vld [vmem:[%s1 + $0xc] sm:$0xf]
  %v22 = vld [vmem:[%s1 + $0x10] sm:$0xf]
  %v23 = vld [vmem:[%s1 + $0x14] sm:$0xf]
  %v24 = vld [vmem:[%s1 + $0x18] sm:$0xf]
  %v25 = vld [vmem:[%s1 + $0x1c] sm:$0xf]
  %v30 = vunpack.c.l.b16 %v14
  %v31 = vunpack.c.l.b16 %v15
  %v32 = vunpack.c.l.b16 %v16
  %v33 = vunpack.c.l.b16 %v17
  %v34 = vpack.c.b16 %v31, %v30
  %v35 = vpack.c.b16 %v33, %v32
  %v44 = vunpack.c.l.b16 %v18
  %v45 = vunpack.c.l.b16 %v19
  %v46 = vunpack.c.l.b16 %v20
  %v47 = vunpack.c.l.b16 %v21
  %v48 = vunpack.c.l.b16 %v22
  %v49 = vunpack.c.l.b16 %v23
  %v50 = vunpack.c.l.b16 %v24
  %v51 = vunpack.c.l.b16 %v25
  %v52 = vpack.c.b16 %v45, %v44
  %v53 = vpack.c.b16 %v47, %v46
  %v54 = vpack.c.b16 %v49, %v48
  %v55 = vpack.c.b16 %v51, %v50
  %vm60 = vcmask 523264
  %v62 = vsel %vm60, %v34, 0
  %v65 = vsel %vm60, %v35, 0
  %67 = vmatprep.subr.bf16.mxu0 0
  %68 = vmatpush1.bf16.msra.mxu0 %v52
  %69 = vmatprep.subr.bf16.mxu0 0
  %70 = vmatpush1.bf16.msra.mxu0 %v53
  %71 = vmatprep.subr.bf16.mxu0 0
  %72 = vmatpush1.bf16.msra.mxu0 %v54
  %73 = vmatprep.subr.bf16.mxu0 0
  %74 = vmatpush1.bf16.msra.mxu0 %v55
  %75 = vmatprep.subr.bf16.mxu0 0
  %76 = vmatpush1.bf16.msra.mxu0 0
  %77 = vmatprep.subr.bf16.mxu0 0
  %78 = vmatpush1.bf16.msra.mxu0 0
  %79 = vmatprep.subr.bf16.mxu0 0
  %80 = vmatpush1.bf16.msra.mxu0 0
  %81 = vmatprep.subr.bf16.mxu0 0
  %82 = vmatpush1.bf16.msra.mxu0 0
  %83 = vmatprep.subr.bf16.mxu0 0
  %84 = vmatpush1.bf16.msra.mxu0 0
  %85 = vmatprep.subr.bf16.mxu0 0
  %86 = vmatpush1.bf16.msra.mxu0 0
  %87 = vmatprep.subr.bf16.mxu0 0
  %88 = vmatpush1.bf16.msra.mxu0 0
  %89 = vmatprep.subr.bf16.mxu0 0
  %90 = vmatpush1.bf16.msra.mxu0 0
  %91 = vmatprep.subr.bf16.mxu0 0
  %92 = vmatpush1.bf16.msra.mxu0 0
  %93 = vmatprep.subr.bf16.mxu0 0
  %94 = vmatpush1.bf16.msra.mxu0 0
  %95 = vmatprep.subr.bf16.mxu0 0
  %96 = vmatpush1.bf16.msra.mxu0 0
  %97 = vmatprep.subr.bf16.mxu0 0
  %98 = vmatpush1.bf16.msra.mxu0 0
  %99 = vmatprep.mubr.bf16.mxu0 0
  %100 = vmatmul.mubr.bf16.gmra.mrb[0].mxu0 %v62
  %v101 = vpop.f32.mrb[0].mxu0
  %v102 = vadd.f32 0.0, %v101
  %v103 = vpop.f32.mrb[0].mxu0
  %v104 = vpop.f32.mrb[0].mxu0
  %v105 = vadd.f32 0.0, %v104
  %v106 = vpop.f32.mrb[0].mxu0
  %107 = vmatprep.mubr.bf16.mxu0 0
  %108 = vmatmul.mubr.bf16.gmra.mrb[0].mxu0 %v65
  %v109 = vpop.f32.mrb[0].mxu0
  %v110 = vadd.f32 0.0, %v109
  %v111 = vpop.f32.mrb[0].mxu0
  %v112 = vpop.f32.mrb[0].mxu0
  %v113 = vadd.f32 0.0, %v112
  %v114 = vpop.f32.mrb[0].mxu0
  %115 = vdwg.mxu0
  %v116 = vpack.c.bf16 %v105, %v102
  %v117 = vpack.c.bf16 %v113, %v110
  %v120 = vunpack.c.l.b16 %v116
  %v121 = vunpack.c.h.b16 %v116
  %v122 = vunpack.c.l.b16 %v117
  %v123 = vunpack.c.h.b16 %v117
  %v124 = vpack.c.b16 %v120, %v120
  %v125 = vpack.c.b16 %v121, %v121
  %v126 = vpack.c.b16 %v122, %v122
  %v127 = vpack.c.b16 %v123, %v123
  %132 = vst [vmem:[%s2] sm:$0xf] %v124
  %133 = vst [vmem:[%s2 + $0x4] sm:$0xf] %v125
  %134 = vst [vmem:[%s2 + $0x8] sm:$0xf] %v126
  %135 = vst [vmem:[%s2 + $0xc] sm:$0xf] %v127
  %v136 = vadd.f32 %v102, %v105
  %v137 = vadd.f32 %v136, %v110
  %v138 = vadd.f32 %v137, %v113
  %v139 = vrot.slane %v138, 4
  %v140 = vadd.f32 %v138, %v139
  %v141 = vrot.slane %v140, 2
  %v142 = vadd.f32 %v140, %v141
  %v143 = vrot.slane %v142, 1
  %v144 = vadd.f32 %v142, %v143
  %v145 = vmul.f32 %v102, %v102
  %v146 = vmul.f32 %v105, %v105
  %v147 = vmul.f32 %v110, %v110
  %v148 = vmul.f32 %v113, %v113
  %v149 = vadd.f32 %v145, %v146
  %v150 = vadd.f32 %v149, %v147
  %v151 = vadd.f32 %v150, %v148
  %v152 = vrot.slane %v151, 4
  %v153 = vadd.f32 %v151, %v152
  %v154 = vrot.slane %v153, 2
  %v155 = vadd.f32 %v153, %v154
  %v156 = vrot.slane %v155, 1
  %v157 = vadd.f32 %v155, %v156
  %v158 = vlaneseq
  %v159 = vshrl.u32 %v158, 7
  %vm160 = vcmp.eq.s32.totalorder %v159, 0
  %vm161 = vcmp.eq.s32.totalorder %v159, 1
  %v162 = vsel %vm161, %v157, 0.0
  %v163 = vsel %vm160, %v144, %v162
  %164 = vst [vmem:[%s3] sm:$0xff] %v163
  // Predicated region
  $region10: #{ae_forward.13} parent=0 // pred_check
    _
  $region11: #{ae_forward.13} parent=0 // pred_check_branch
    %166 = sbr.rel (0) target = $region13
  $region12: #{ae_forward.13} parent=0 // pred_region
    _
  $region13: #{ae_forward.13} parent=0 // pred_fallthru
    _
  // Predicated region
  $region14: #{ae_forward.13} parent=0 // pred_check
    _
  $region15: #{ae_forward.13} parent=0 // pred_check_branch
    %168 = sbr.rel (0) target = $region17
  $region16: #{ae_forward.13} parent=0 // pred_region
    _
  $region17: #{ae_forward.13} parent=0 // pred_fallthru
    _
  // Predicated region
  $region18: #{ae_forward.13} parent=0 // pred_check
    _
  $region19: #{ae_forward.13} parent=0 // pred_check_branch
    %170 = sbr.rel (0) target = $region21
  $region20: #{ae_forward.13} parent=0 // pred_region
    _
  $region21: #{ae_forward.13} parent=0 // pred_fallthru
    _
  // Predicated region
  $region22: #{ae_forward.13} parent=0 // pred_check
    _
  $region23: #{ae_forward.13} parent=0 // pred_check_branch
    %172 = sbr.rel (0) target = $region25
  $region24: #{ae_forward.13} parent=0 // pred_region
    _
  $region25: #{ae_forward.13} parent=0 // pred_fallthru
    _

// kernel: ae_forward.15
$region0: #{ae_forward.15}
  #allocation0 [shape = 'u32[]', space=smem, size = 0x4, offset = 0x4, fixed_abs, tag = 'smem constant byte address 0x4 - core index']
  #allocation1 [shape = 'u32[144,128]{1,0:T(1,128)}', space=vmem, size = 0x12000, scoped, tag = 'internal scratch']
  %s0 = inlined_call_operand.vmem [shape: bf16[128,32], index: 0, kind: input, shape index: {}]
  %s1 = inlined_call_operand.vmem [shape: bf16[32,128], index: 1, kind: input, shape index: {}]
  %s2 = inlined_call_operand.vmem [shape: bf16[128,128], index: 2, kind: output, shape index: {0}]
  %s3 = inlined_call_operand.vmem [shape: f32[8,128], index: 3, kind: output, shape index: {1}]
  %4 = xla_tuple %s2, %s3
  %s5 = sld [smem:[#allocation0]]
  $region26: #{ae_forward.15} parent=0
    _
  %s7 = ssub.s32 1, %s5
  %s8 = scalar_select 0, %s7, %s5
  // Predicated region
  $region2: #{ae_forward.15} parent=0 // pred_check
    _
  $region3: #{ae_forward.15} parent=0 // pred_check_branch
    %10 = sbr.rel (0) target = $region5
  $region4: #{ae_forward.15} parent=0 // pred_region
    _
  $region5: #{ae_forward.15} parent=0 // pred_fallthru
    _
  // Predicated region
  $region6: #{ae_forward.15} parent=0 // pred_check
    _
  $region7: #{ae_forward.15} parent=0 // pred_check_branch
    %12 = sbr.rel (0) target = $region9
  $region8: #{ae_forward.15} parent=0 // pred_region
    _
  $region9: #{ae_forward.15} parent=0 // pred_fallthru
    _
  %v14 = vld [vmem:[%s0] sm:$0xf]
  %v15 = vld [vmem:[%s0 + $0x4] sm:$0xf]
  %v16 = vld [vmem:[%s0 + $0x8] sm:$0xf]
  %v17 = vld [vmem:[%s0 + $0xc] sm:$0xf]
  %v18 = vld [vmem:[%s0 + $0x10] sm:$0xf]
  %v19 = vld [vmem:[%s0 + $0x14] sm:$0xf]
  %v20 = vld [vmem:[%s0 + $0x18] sm:$0xf]
  %v21 = vld [vmem:[%s0 + $0x1c] sm:$0xf]
  %v22 = vld [vmem:[%s0 + $0x20] sm:$0xf]
  %v23 = vld [vmem:[%s0 + $0x24] sm:$0xf]
  %v24 = vld [vmem:[%s0 + $0x28] sm:$0xf]
  %v25 = vld [vmem:[%s0 + $0x2c] sm:$0xf]
  %v26 = vld [vmem:[%s0 + $0x30] sm:$0xf]
  %v27 = vld [vmem:[%s0 + $0x34] sm:$0xf]
  %v28 = vld [vmem:[%s0 + $0x38] sm:$0xf]
  %v29 = vld [vmem:[%s0 + $0x3c] sm:$0xf]
  %v30 = vld [vmem:[%s1] sm:$0xf]
  %v31 = vld [vmem:[%s1 + $0x4] sm:$0xf]
  %v32 = vld [vmem:[%s1 + $0x8] sm:$0xf]
  %v33 = vld [vmem:[%s1 + $0xc] sm:$0xf]
  %v50 = vunpack.c.l.b16 %v14
  %v51 = vunpack.c.l.b16 %v15
  %v52 = vunpack.c.l.b16 %v16
  %v53 = vunpack.c.l.b16 %v17
  %v54 = vunpack.c.l.b16 %v18
  %v55 = vunpack.c.l.b16 %v19
  %v56 = vunpack.c.l.b16 %v20
  %v57 = vunpack.c.l.b16 %v21
  %v58 = vunpack.c.l.b16 %v22
  %v59 = vunpack.c.l.b16 %v23
  %v60 = vunpack.c.l.b16 %v24
  %v61 = vunpack.c.l.b16 %v25
  %v62 = vunpack.c.l.b16 %v26
  %v63 = vunpack.c.l.b16 %v27
  %v64 = vunpack.c.l.b16 %v28
  %v65 = vunpack.c.l.b16 %v29
  %v66 = vpack.c.b16 %v51, %v50
  %v67 = vpack.c.b16 %v53, %v52
  %v68 = vpack.c.b16 %v55, %v54
  %v69 = vpack.c.b16 %v57, %v56
  %v70 = vpack.c.b16 %v59, %v58
  %v71 = vpack.c.b16 %v61, %v60
  %v72 = vpack.c.b16 %v63, %v62
  %v73 = vpack.c.b16 %v65, %v64
  %v78 = vunpack.c.l.b16 %v30
  %v79 = vunpack.c.l.b16 %v31
  %v80 = vunpack.c.l.b16 %v32
  %v81 = vunpack.c.l.b16 %v33
  %v82 = vpack.c.b16 %v79, %v78
  %v83 = vpack.c.b16 %v81, %v80
  %vm86 = vcmask 261120
  %v88 = vsel %vm86, %v66, 0
  %v91 = vsel %vm86, %v67, 0
  %v94 = vsel %vm86, %v68, 0
  %v97 = vsel %vm86, %v69, 0
  %v100 = vsel %vm86, %v70, 0
  %v103 = vsel %vm86, %v71, 0
  %v106 = vsel %vm86, %v72, 0
  %v109 = vsel %vm86, %v73, 0
  %111 = vmatprep.subr.bf16.mxu0 0
  %112 = vmatpush1.bf16.msra.mxu0 %v82
  %113 = vmatprep.subr.bf16.mxu0 0
  %114 = vmatpush1.bf16.msra.mxu0 %v83
  %115 = vmatprep.subr.bf16.mxu0 0
  %116 = vmatpush1.bf16.msra.mxu0 0
  %117 = vmatprep.subr.bf16.mxu0 0
  %118 = vmatpush1.bf16.msra.mxu0 0
  %119 = vmatprep.subr.bf16.mxu0 0
  %120 = vmatpush1.bf16.msra.mxu0 0
  %121 = vmatprep.subr.bf16.mxu0 0
  %122 = vmatpush1.bf16.msra.mxu0 0
  %123 = vmatprep.subr.bf16.mxu0 0
  %124 = vmatpush1.bf16.msra.mxu0 0
  %125 = vmatprep.subr.bf16.mxu0 0
  %126 = vmatpush1.bf16.msra.mxu0 0
  %127 = vmatprep.subr.bf16.mxu0 0
  %128 = vmatpush1.bf16.msra.mxu0 0
  %129 = vmatprep.subr.bf16.mxu0 0
  %130 = vmatpush1.bf16.msra.mxu0 0
  %131 = vmatprep.subr.bf16.mxu0 0
  %132 = vmatpush1.bf16.msra.mxu0 0
  %133 = vmatprep.subr.bf16.mxu0 0
  %134 = vmatpush1.bf16.msra.mxu0 0
  %135 = vmatprep.subr.bf16.mxu0 0
  %136 = vmatpush1.bf16.msra.mxu0 0
  %137 = vmatprep.subr.bf16.mxu0 0
  %138 = vmatpush1.bf16.msra.mxu0 0
  %139 = vmatprep.subr.bf16.mxu0 0
  %140 = vmatpush1.bf16.msra.mxu0 0
  %141 = vmatprep.subr.bf16.mxu0 0
  %142 = vmatpush1.bf16.msra.mxu0 0
  %143 = vmatprep.mubr.bf16.mxu0 0
  %144 = vmatmul.mubr.bf16.gmra.mrb[0].mxu0 %v88
  %v145 = vpop.f32.mrb[0].mxu0
  %v146 = vadd.f32 0.0, %v145
  %v147 = vpop.f32.mrb[0].mxu0
  %v148 = vpop.f32.mrb[0].mxu0
  %v149 = vadd.f32 0.0, %v148
  %v150 = vpop.f32.mrb[0].mxu0
  %151 = vmatprep.mubr.bf16.mxu0 0
  %152 = vmatmul.mubr.bf16.gmra.mrb[0].mxu0 %v91
  %v153 = vpop.f32.mrb[0].mxu0
  %v154 = vadd.f32 0.0, %v153
  %v155 = vpop.f32.mrb[0].mxu0
  %v156 = vpop.f32.mrb[0].mxu0
  %v157 = vadd.f32 0.0, %v156
  %v158 = vpop.f32.mrb[0].mxu0
  %159 = vmatprep.mubr.bf16.mxu0 0
  %160 = vmatmul.mubr.bf16.gmra.mrb[0].mxu0 %v94
  %v161 = vpop.f32.mrb[0].mxu0
  %v162 = vadd.f32 0.0, %v161
  %v163 = vpop.f32.mrb[0].mxu0
  %v164 = vpop.f32.mrb[0].mxu0
  %v165 = vadd.f32 0.0, %v164
  %v166 = vpop.f32.mrb[0].mxu0
  %167 = vmatprep.mubr.bf16.mxu0 0
  %168 = vmatmul.mubr.bf16.gmra.mrb[0].mxu0 %v97
  %v169 = vpop.f32.mrb[0].mxu0
  %v170 = vadd.f32 0.0, %v169
  %v171 = vpop.f32.mrb[0].mxu0
  %v172 = vpop.f32.mrb[0].mxu0
  %v173 = vadd.f32 0.0, %v172
  %v174 = vpop.f32.mrb[0].mxu0
  %175 = vmatprep.mubr.bf16.mxu0 0
  %176 = vmatmul.mubr.bf16.gmra.mrb[0].mxu0 %v100
  %v177 = vpop.f32.mrb[0].mxu0
  %v178 = vadd.f32 0.0, %v177
  %v179 = vpop.f32.mrb[0].mxu0
  %v180 = vpop.f32.mrb[0].mxu0
  %v181 = vadd.f32 0.0, %v180
  %v182 = vpop.f32.mrb[0].mxu0
  %183 = vmatprep.mubr.bf16.mxu0 0
  %184 = vmatmul.mubr.bf16.gmra.mrb[0].mxu0 %v103
  %v185 = vpop.f32.mrb[0].mxu0
  %v186 = vadd.f32 0.0, %v185
  %v187 = vpop.f32.mrb[0].mxu0
  %v188 = vpop.f32.mrb[0].mxu0
  %v189 = vadd.f32 0.0, %v188
  %v190 = vpop.f32.mrb[0].mxu0
  %191 = vmatprep.mubr.bf16.mxu0 0
  %192 = vmatmul.mubr.bf16.gmra.mrb[0].mxu0 %v106
  %v193 = vpop.f32.mrb[0].mxu0
  %v194 = vadd.f32 0.0, %v193
  %v195 = vpop.f32.mrb[0].mxu0
  %v196 = vpop.f32.mrb[0].mxu0
  %v197 = vadd.f32 0.0, %v196
  %v198 = vpop.f32.mrb[0].mxu0
  %199 = vmatprep.mubr.bf16.mxu0 0
  %200 = vmatmul.mubr.bf16.gmra.mrb[0].mxu0 %v109
  %v201 = vpop.f32.mrb[0].mxu0
  %v202 = vadd.f32 0.0, %v201
  %v203 = vpop.f32.mrb[0].mxu0
  %v204 = vpop.f32.mrb[0].mxu0
  %v205 = vadd.f32 0.0, %v204
  %v206 = vpop.f32.mrb[0].mxu0
  %207 = vdwg.mxu0
  %v208 = vpack.c.bf16 %v149, %v146
  %v209 = vpack.c.bf16 %v157, %v154
  %v210 = vpack.c.bf16 %v165, %v162
  %v211 = vpack.c.bf16 %v173, %v170
  %v212 = vpack.c.bf16 %v181, %v178
  %v213 = vpack.c.bf16 %v189, %v186
  %v214 = vpack.c.bf16 %v197, %v194
  %v215 = vpack.c.bf16 %v205, %v202
  %v224 = vunpack.c.l.b16 %v208
  %v225 = vunpack.c.h.b16 %v208
  %v226 = vunpack.c.l.b16 %v209
  %v227 = vunpack.c.h.b16 %v209
  %v228 = vunpack.c.l.b16 %v210
  %v229 = vunpack.c.h.b16 %v210
  %v230 = vunpack.c.l.b16 %v211
  %v231 = vunpack.c.h.b16 %v211
  %v232 = vunpack.c.l.b16 %v212
  %v233 = vunpack.c.h.b16 %v212
  %v234 = vunpack.c.l.b16 %v213
  %v235 = vunpack.c.h.b16 %v213
  %v236 = vunpack.c.l.b16 %v214
  %v237 = vunpack.c.h.b16 %v214
  %v238 = vunpack.c.l.b16 %v215
  %v239 = vunpack.c.h.b16 %v215
  %v240 = vpack.c.b16 %v224, %v224
  %v241 = vpack.c.b16 %v225, %v225
  %v242 = vpack.c.b16 %v226, %v226
  %v243 = vpack.c.b16 %v227, %v227
  %v244 = vpack.c.b16 %v228, %v228
  %v245 = vpack.c.b16 %v229, %v229
  %v246 = vpack.c.b16 %v230, %v230
  %v247 = vpack.c.b16 %v231, %v231
  %v248 = vpack.c.b16 %v232, %v232
  %v249 = vpack.c.b16 %v233, %v233
  %v250 = vpack.c.b16 %v234, %v234
  %v251 = vpack.c.b16 %v235, %v235
  %v252 = vpack.c.b16 %v236, %v236
  %v253 = vpack.c.b16 %v237, %v237
  %v254 = vpack.c.b16 %v238, %v238
  %v255 = vpack.c.b16 %v239, %v239
  %272 = vst [vmem:[%s2] sm:$0xf] %v240
  %273 = vst [vmem:[%s2 + $0x4] sm:$0xf] %v241
  %274 = vst [vmem:[%s2 + $0x8] sm:$0xf] %v242
  %275 = vst [vmem:[%s2 + $0xc] sm:$0xf] %v243
  %276 = vst [vmem:[%s2 + $0x10] sm:$0xf] %v244
  %277 = vst [vmem:[%s2 + $0x14] sm:$0xf] %v245
  %278 = vst [vmem:[%s2 + $0x18] sm:$0xf] %v246
  %279 = vst [vmem:[%s2 + $0x1c] sm:$0xf] %v247
  %280 = vst [vmem:[%s2 + $0x20] sm:$0xf] %v248
  %281 = vst [vmem:[%s2 + $0x24] sm:$0xf] %v249
  %282 = vst [vmem:[%s2 + $0x28] sm:$0xf] %v250
  %283 = vst [vmem:[%s2 + $0x2c] sm:$0xf] %v251
  %284 = vst [vmem:[%s2 + $0x30] sm:$0xf] %v252
  %285 = vst [vmem:[%s2 + $0x34] sm:$0xf] %v253
  %286 = vst [vmem:[%s2 + $0x38] sm:$0xf] %v254
  %287 = vst [vmem:[%s2 + $0x3c] sm:$0xf] %v255
  %v288 = vadd.f32 %v146, %v149
  %v289 = vadd.f32 %v288, %v154
  %v290 = vadd.f32 %v289, %v157
  %v291 = vadd.f32 %v290, %v162
  %v292 = vadd.f32 %v291, %v165
  %v293 = vadd.f32 %v292, %v170
  %v294 = vadd.f32 %v293, %v173
  %v295 = vadd.f32 %v294, %v178
  %v296 = vadd.f32 %v295, %v181
  %v297 = vadd.f32 %v296, %v186
  %v298 = vadd.f32 %v297, %v189
  %v299 = vadd.f32 %v298, %v194
  %v300 = vadd.f32 %v299, %v197
  %v301 = vadd.f32 %v300, %v202
  %v302 = vadd.f32 %v301, %v205
  %v303 = vrot.slane %v302, 4
  %v304 = vadd.f32 %v302, %v303
  %v305 = vrot.slane %v304, 2
  %v306 = vadd.f32 %v304, %v305
  %v307 = vrot.slane %v306, 1
  %v308 = vadd.f32 %v306, %v307
  %v309 = vmul.f32 %v146, %v146
  %v310 = vmul.f32 %v149, %v149
  %v311 = vmul.f32 %v154, %v154
  %v312 = vmul.f32 %v157, %v157
  %v313 = vmul.f32 %v162, %v162
  %v314 = vmul.f32 %v165, %v165
  %v315 = vmul.f32 %v170, %v170
  %v316 = vmul.f32 %v173, %v173
  %v317 = vmul.f32 %v178, %v178
  %v318 = vmul.f32 %v181, %v181
  %v319 = vmul.f32 %v186, %v186
  %v320 = vmul.f32 %v189, %v189
  %v321 = vmul.f32 %v194, %v194
  %v322 = vmul.f32 %v197, %v197
  %v323 = vmul.f32 %v202, %v202
  %v324 = vmul.f32 %v205, %v205
  %v325 = vadd.f32 %v309, %v310
  %v326 = vadd.f32 %v325, %v311
  %v327 = vadd.f32 %v326, %v312
  %v328 = vadd.f32 %v327, %v313
  %v329 = vadd.f32 %v328, %v314
  %v330 = vadd.f32 %v329, %v315
  %v331 = vadd.f32 %v330, %v316
  %v332 = vadd.f32 %v331, %v317
  %v333 = vadd.f32 %v332, %v318
  %v334 = vadd.f32 %v333, %v319
  %v335 = vadd.f32 %v334, %v320
  %v336 = vadd.f32 %v335, %v321
  %v337 = vadd.f32 %v336, %v322
  %v338 = vadd.f32 %v337, %v323
  %v339 = vadd.f32 %v338, %v324
  %v340 = vrot.slane %v339, 4
  %v341 = vadd.f32 %v339, %v340
  %v342 = vrot.slane %v341, 2
  %v343 = vadd.f32 %v341, %v342
  %v344 = vrot.slane %v343, 1
  %v345 = vadd.f32 %v343, %v344
  %v346 = vlaneseq
  %v347 = vshrl.u32 %v346, 7
  %vm348 = vcmp.eq.s32.totalorder %v347, 0
  %vm349 = vcmp.eq.s32.totalorder %v347, 1
  %v350 = vsel %vm349, %v345, 0.0
  %v351 = vsel %vm348, %v308, %v350
  %352 = vst [vmem:[%s3] sm:$0xff] %v351
  // Predicated region
  $region10: #{ae_forward.15} parent=0 // pred_check
    _
  $region11: #{ae_forward.15} parent=0 // pred_check_branch
    %354 = sbr.rel (0) target = $region13
  $region12: #{ae_forward.15} parent=0 // pred_region
    _
  $region13: #{ae_forward.15} parent=0 // pred_fallthru
    _
  // Predicated region
  $region14: #{ae_forward.15} parent=0 // pred_check
    _
  $region15: #{ae_forward.15} parent=0 // pred_check_branch
    %356 = sbr.rel (0) target = $region17
  $region16: #{ae_forward.15} parent=0 // pred_region
    _
  $region17: #{ae_forward.15} parent=0 // pred_fallthru
    _
  // Predicated region
  $region18: #{ae_forward.15} parent=0 // pred_check
    _
  $region19: #{ae_forward.15} parent=0 // pred_check_branch
    %358 = sbr.rel (0) target = $region21
  $region20: #{ae_forward.15} parent=0 // pred_region
    _
  $region21: #{ae_forward.15} parent=0 // pred_fallthru
    _
  // Predicated region
  $region22: #{ae_forward.15} parent=0 // pred_check
    _
  $region23: #{ae_forward.15} parent=0 // pred_check_branch
    %360 = sbr.rel (0) target = $region25
  $region24: #{ae_forward.15} parent=0 // pred_region
    _
  $region25: #{ae_forward.15} parent=0 // pred_fallthru
    _

// kernel: ae_forward.17
$region0: #{ae_forward.17}
  #allocation0 [shape = 'u32[]', space=smem, size = 0x4, offset = 0x4, fixed_abs, tag = 'smem constant byte address 0x4 - core index']
  #allocation1 [shape = 'u32[144,128]{1,0:T(1,128)}', space=vmem, size = 0x12000, scoped, tag = 'internal scratch']
  %s0 = inlined_call_operand.vmem [shape: bf16[512,72], index: 0, kind: input, shape index: {}]
  %s1 = inlined_call_operand.vmem [shape: bf16[72,128], index: 1, kind: input, shape index: {}]
  %s2 = inlined_call_operand.vmem [shape: f32[1,128], index: 2, kind: input, shape index: {}]
  %s3 = inlined_call_operand.vmem [shape: f32[512,128], index: 3, kind: output, shape index: {}]
  %s4 = sld [smem:[#allocation0]]
  $region22: #{ae_forward.17} parent=0
    _
  %s6 = ssub.s32 1, %s4
  %s7 = scalar_select 0, %s6, %s4
  // Predicated region
  $region2: #{ae_forward.17} parent=0 // pred_check
    _
  $region3: #{ae_forward.17} parent=0 // pred_check_branch
    %9 = sbr.rel (0) target = $region5
  $region4: #{ae_forward.17} parent=0 // pred_region
    _
  $region5: #{ae_forward.17} parent=0 // pred_fallthru
    _
  // Predicated region
  $region6: #{ae_forward.17} parent=0 // pred_check
    _
  $region7: #{ae_forward.17} parent=0 // pred_check_branch
    %11 = sbr.rel (0) target = $region9
  $region8: #{ae_forward.17} parent=0 // pred_region
    _
  $region9: #{ae_forward.17} parent=0 // pred_fallthru
    _
  // Predicated region
  $region10: #{ae_forward.17} parent=0 // pred_check
    _
  $region11: #{ae_forward.17} parent=0 // pred_check_branch
    %13 = sbr.rel (0) target = $region13
  $region12: #{ae_forward.17} parent=0 // pred_region
    _
  $region13: #{ae_forward.17} parent=0 // pred_fallthru
    _
  %v15 = vld [vmem:[%s0] sm:$0xf]
  %v16 = vld [vmem:[%s0 + $0x4] sm:$0xf]
  %v17 = vld [vmem:[%s0 + $0x8] sm:$0xf]
  %v18 = vld [vmem:[%s0 + $0xc] sm:$0xf]
  %v19 = vld [vmem:[%s0 + $0x10] sm:$0xf]
  %v20 = vld [vmem:[%s0 + $0x14] sm:$0xf]
  %v21 = vld [vmem:[%s0 + $0x18] sm:$0xf]
  %v22 = vld [vmem:[%s0 + $0x1c] sm:$0xf]
  %v23 = vld [vmem:[%s0 + $0x20] sm:$0xf]
  %v24 = vld [vmem:[%s0 + $0x24] sm:$0xf]
  %v25 = vld [vmem:[%s0 + $0x28] sm:$0xf]
  %v26 = vld [vmem:[%s0 + $0x2c] sm:$0xf]
  %v27 = vld [vmem:[%s0 + $0x30] sm:$0xf]
  %v28 = vld [vmem:[%s0 + $0x34] sm:$0xf]
  %v29 = vld [vmem:[%s0 + $0x38] sm:$0xf]
  %v30 = vld [vmem:[%s0 + $0x3c] sm:$0xf]
  %v31 = vld [vmem:[%s0 + $0x40] sm:$0xf]
  %v32 = vld [vmem:[%s0 + $0x44] sm:$0xf]
  %v33 = vld [vmem:[%s0 + $0x48] sm:$0xf]
  %v34 = vld [vmem:[%s0 + $0x4c] sm:$0xf]
  %v35 = vld [vmem:[%s0 + $0x50] sm:$0xf]
  %v36 = vld [vmem:[%s0 + $0x54] sm:$0xf]
  %v37 = vld [vmem:[%s0 + $0x58] sm:$0xf]
  %v38 = vld [vmem:[%s0 + $0x5c] sm:$0xf]
  %v39 = vld [vmem:[%s0 + $0x60] sm:$0xf]
  %v40 = vld [vmem:[%s0 + $0x64] sm:$0xf]
  %v41 = vld [vmem:[%s0 + $0x68] sm:$0xf]
  %v42 = vld [vmem:[%s0 + $0x6c] sm:$0xf]
  %v43 = vld [vmem:[%s0 + $0x70] sm:$0xf]
  %v44 = vld [vmem:[%s0 + $0x74] sm:$0xf]
  %v45 = vld [vmem:[%s0 + $0x78] sm:$0xf]
  %v46 = vld [vmem:[%s0 + $0x7c] sm:$0xf]
  %v47 = vld [vmem:[%s0 + $0x80] sm:$0xf]
  %v48 = vld [vmem:[%s0 + $0x84] sm:$0xf]
  %v49 = vld [vmem:[%s0 + $0x88] sm:$0xf]
  %v50 = vld [vmem:[%s0 + $0x8c] sm:$0xf]
  %v51 = vld [vmem:[%s0 + $0x90] sm:$0xf]
  %v52 = vld [vmem:[%s0 + $0x94] sm:$0xf]
  %v53 = vld [vmem:[%s0 + $0x98] sm:$0xf]
  %v54 = vld [vmem:[%s0 + $0x9c] sm:$0xf]
  %v55 = vld [vmem:[%s0 + $0xa0] sm:$0xf]
  %v56 = vld [vmem:[%s0 + $0xa4] sm:$0xf]
  %v57 = vld [vmem:[%s0 + $0xa8] sm:$0xf]
  %v58 = vld [vmem:[%s0 + $0xac] sm:$0xf]
  %v59 = vld [vmem:[%s0 + $0xb0] sm:$0xf]
  %v60 = vld [vmem:[%s0 + $0xb4] sm:$0xf]
  %v61 = vld [vmem:[%s0 + $0xb8] sm:$0xf]
  %v62 = vld [vmem:[%s0 + $0xbc] sm:$0xf]
  %v63 = vld [vmem:[%s0 + $0xc0] sm:$0xf]
  %v64 = vld [vmem:[%s0 + $0xc4] sm:$0xf]
  %v65 = vld [vmem:[%s0 + $0xc8] sm:$0xf]
  %v66 = vld [vmem:[%s0 + $0xcc] sm:$0xf]
  %v67 = vld [vmem:[%s0 + $0xd0] sm:$0xf]
  %v68 = vld [vmem:[%s0 + $0xd4] sm:$0xf]
  %v69 = vld [vmem:[%s0 + $0xd8] sm:$0xf]
  %v70 = vld [vmem:[%s0 + $0xdc] sm:$0xf]
  %v71 = vld [vmem:[%s0 + $0xe0] sm:$0xf]
  %v72 = vld [vmem:[%s0 + $0xe4] sm:$0xf]
  %v73 = vld [vmem:[%s0 + $0xe8] sm:$0xf]
  %v74 = vld [vmem:[%s0 + $0xec] sm:$0xf]
  %v75 = vld [vmem:[%s0 + $0xf0] sm:$0xf]
  %v76 = vld [vmem:[%s0 + $0xf4] sm:$0xf]
  %v77 = vld [vmem:[%s0 + $0xf8] sm:$0xf]
  %v78 = vld [vmem:[%s0 + $0xfc] sm:$0xf]
  %v79 = vld [vmem:[%s1] sm:$0xf]
  %v80 = vld [vmem:[%s1 + $0x4] sm:$0xf]
  %v81 = vld [vmem:[%s1 + $0x8] sm:$0xf]
  %v82 = vld [vmem:[%s1 + $0xc] sm:$0xf]
  %v83 = vld [vmem:[%s1 + $0x10] sm:$0xf]
  %v84 = vld [vmem:[%s1 + $0x14] sm:$0xf]
  %v85 = vld [vmem:[%s1 + $0x18] sm:$0xf]
  %v86 = vld [vmem:[%s1 + $0x1c] sm:$0xf]
  %v87 = vld [vmem:[%s1 + $0x20] sm:$0xf]
  %v88 = vld [vmem:[%s2] sm:$0x1]
  %v90 = vlaneseq
  %v91 = vshrl.u32 %v90, 7
  %v92 = vsub.s32 0, %v91
  %v93 = vrot.slane %v88, %v92
  %v159 = vunpack.c.l.b16 %v15
  %v160 = vunpack.c.l.b16 %v16
  %v161 = vunpack.c.l.b16 %v17
  %v162 = vunpack.c.l.b16 %v18
  %v163 = vunpack.c.l.b16 %v19
  %v164 = vunpack.c.l.b16 %v20
  %v165 = vunpack.c.l.b16 %v21
  %v166 = vunpack.c.l.b16 %v22
  %v167 = vunpack.c.l.b16 %v23
  %v168 = vunpack.c.l.b16 %v24
  %v169 = vunpack.c.l.b16 %v25
  %v170 = vunpack.c.l.b16 %v26
  %v171 = vunpack.c.l.b16 %v27
  %v172 = vunpack.c.l.b16 %v28
  %v173 = vunpack.c.l.b16 %v29
  %v174 = vunpack.c.l.b16 %v30
  %v175 = vunpack.c.l.b16 %v31
  %v176 = vunpack.c.l.b16 %v32
  %v177 = vunpack.c.l.b16 %v33
  %v178 = vunpack.c.l.b16 %v34
  %v179 = vunpack.c.l.b16 %v35
  %v180 = vunpack.c.l.b16 %v36
  %v181 = vunpack.c.l.b16 %v37
  %v182 = vunpack.c.l.b16 %v38
  %v183 = vunpack.c.l.b16 %v39
  %v184 = vunpack.c.l.b16 %v40
  %v185 = vunpack.c.l.b16 %v41
  %v186 = vunpack.c.l.b16 %v42
  %v187 = vunpack.c.l.b16 %v43
  %v188 = vunpack.c.l.b16 %v44
  %v189 = vunpack.c.l.b16 %v45
  %v190 = vunpack.c.l.b16 %v46
  %v191 = vunpack.c.l.b16 %v47
  %v192 = vunpack.c.l.b16 %v48
  %v193 = vunpack.c.l.b16 %v49
  %v194 = vunpack.c.l.b16 %v50
  %v195 = vunpack.c.l.b16 %v51
  %v196 = vunpack.c.l.b16 %v52
  %v197 = vunpack.c.l.b16 %v53
  %v198 = vunpack.c.l.b16 %v54
  %v199 = vunpack.c.l.b16 %v55
  %v200 = vunpack.c.l.b16 %v56
  %v201 = vunpack.c.l.b16 %v57
  %v202 = vunpack.c.l.b16 %v58
  %v203 = vunpack.c.l.b16 %v59
  %v204 = vunpack.c.l.b16 %v60
  %v205 = vunpack.c.l.b16 %v61
  %v206 = vunpack.c.l.b16 %v62
  %v207 = vunpack.c.l.b16 %v63
  %v208 = vunpack.c.l.b16 %v64
  %v209 = vunpack.c.l.b16 %v65
  %v210 = vunpack.c.l.b16 %v66
  %v211 = vunpack.c.l.b16 %v67
  %v212 = vunpack.c.l.b16 %v68
  %v213 = vunpack.c.l.b16 %v69
  %v214 = vunpack.c.l.b16 %v70
  %v215 = vunpack.c.l.b16 %v71
  %v216 = vunpack.c.l.b16 %v72
  %v217 = vunpack.c.l.b16 %v73
  %v218 = vunpack.c.l.b16 %v74
  %v219 = vunpack.c.l.b16 %v75
  %v220 = vunpack.c.l.b16 %v76
  %v221 = vunpack.c.l.b16 %v77
  %v222 = vunpack.c.l.b16 %v78
  %v223 = vpack.c.b16 %v160, %v159
  %v224 = vpack.c.b16 %v162, %v161
  %v225 = vpack.c.b16 %v164, %v163
  %v226 = vpack.c.b16 %v166, %v165
  %v227 = vpack.c.b16 %v168, %v167
  %v228 = vpack.c.b16 %v170, %v169
  %v229 = vpack.c.b16 %v172, %v171
  %v230 = vpack.c.b16 %v174, %v173
  %v231 = vpack.c.b16 %v176, %v175
  %v232 = vpack.c.b16 %v178, %v177
  %v233 = vpack.c.b16 %v180, %v179
  %v234 = vpack.c.b16 %v182, %v181
  %v235 = vpack.c.b16 %v184, %v183
  %v236 = vpack.c.b16 %v186, %v185
  %v237 = vpack.c.b16 %v188, %v187
  %v238 = vpack.c.b16 %v190, %v189
  %v239 = vpack.c.b16 %v192, %v191
  %v240 = vpack.c.b16 %v194, %v193
  %v241 = vpack.c.b16 %v196, %v195
  %v242 = vpack.c.b16 %v198, %v197
  %v243 = vpack.c.b16 %v200, %v199
  %v244 = vpack.c.b16 %v202, %v201
  %v245 = vpack.c.b16 %v204, %v203
  %v246 = vpack.c.b16 %v206, %v205
  %v247 = vpack.c.b16 %v208, %v207
  %v248 = vpack.c.b16 %v210, %v209
  %v249 = vpack.c.b16 %v212, %v211
  %v250 = vpack.c.b16 %v214, %v213
  %v251 = vpack.c.b16 %v216, %v215
  %v252 = vpack.c.b16 %v218, %v217
  %v253 = vpack.c.b16 %v220, %v219
  %v254 = vpack.c.b16 %v222, %v221
  %v264 = vunpack.c.l.b16 %v79
  %v265 = vunpack.c.l.b16 %v80
  %v266 = vunpack.c.l.b16 %v81
  %v267 = vunpack.c.l.b16 %v82
  %v268 = vunpack.c.l.b16 %v83
  %v269 = vunpack.c.l.b16 %v84
  %v270 = vunpack.c.l.b16 %v85
  %v271 = vunpack.c.l.b16 %v86
  %v272 = vunpack.c.l.b16 %v87
  %v273 = vpack.c.b16 %v265, %v264
  %v274 = vpack.c.b16 %v267, %v266
  %v275 = vpack.c.b16 %v269, %v268
  %v276 = vpack.c.b16 %v271, %v270
  %v277 = vpack.c.b16 %v272, %v272
  %vm282 = vcmask 588800
  %v284 = vsel %vm282, %v223, 0
  %v287 = vsel %vm282, %v224, 0
  %v290 = vsel %vm282, %v225, 0
  %v293 = vsel %vm282, %v226, 0
  %v296 = vsel %vm282, %v227, 0
  %v299 = vsel %vm282, %v228, 0
  %v302 = vsel %vm282, %v229, 0
  %v305 = vsel %vm282, %v230, 0
  %v308 = vsel %vm282, %v231, 0
  %v311 = vsel %vm282, %v232, 0
  %v314 = vsel %vm282, %v233, 0
  %v317 = vsel %vm282, %v234, 0
  %v320 = vsel %vm282, %v235, 0
  %v323 = vsel %vm282, %v236, 0
  %v326 = vsel %vm282, %v237, 0
  %v329 = vsel %vm282, %v238, 0
  %v332 = vsel %vm282, %v239, 0
  %v335 = vsel %vm282, %v240, 0
  %v338 = vsel %vm282, %v241, 0
  %v341 = vsel %vm282, %v242, 0
  %v344 = vsel %vm282, %v243, 0
  %v347 = vsel %vm282, %v244, 0
  %v350 = vsel %vm282, %v245, 0
  %v353 = vsel %vm282, %v246, 0
  %v356 = vsel %vm282, %v247, 0
  %v359 = vsel %vm282, %v248, 0
  %v362 = vsel %vm282, %v249, 0
  %v365 = vsel %vm282, %v250, 0
  %v368 = vsel %vm282, %v251, 0
  %v371 = vsel %vm282, %v252, 0
  %v374 = vsel %vm282, %v253, 0
  %v377 = vsel %vm282, %v254, 0
  %vm379 = vcmask 1043456
  %v381 = vsel %vm379, %v277, 0
  %383 = vmatprep.subr.bf16.mxu0 0
  %384 = vmatpush1.bf16.msra.mxu0 %v273
  %385 = vmatprep.subr.bf16.mxu0 0
  %386 = vmatpush1.bf16.msra.mxu0 %v274
  %387 = vmatprep.subr.bf16.mxu0 0
  %388 = vmatpush1.bf16.msra.mxu0 %v275
  %389 = vmatprep.subr.bf16.mxu0 0
  %390 = vmatpush1.bf16.msra.mxu0 %v276
  %391 = vmatprep.subr.bf16.mxu0 0
  %392 = vmatpush1.bf16.msra.mxu0 %v381
  %393 = vmatprep.subr.bf16.mxu0 0
  %394 = vmatpush1.bf16.msra.mxu0 0
  %395 = vmatprep.subr.bf16.mxu0 0
  %396 = vmatpush1.bf16.msra.mxu0 0
  %397 = vmatprep.subr.bf16.mxu0 0
  %398 = vmatpush1.bf16.msra.mxu0 0
  %399 = vmatprep.subr.bf16.mxu0 0
  %400 = vmatpush1.bf16.msra.mxu0 0
  %401 = vmatprep.subr.bf16.mxu0 0
  %402 = vmatpush1.bf16.msra.mxu0 0
  %403 = vmatprep.subr.bf16.mxu0 0
  %404 = vmatpush1.bf16.msra.mxu0 0
  %405 = vmatprep.subr.bf16.mxu0 0
  %406 = vmatpush1.bf16.msra.mxu0 0
  %407 = vmatprep.subr.bf16.mxu0 0
  %408 = vmatpush1.bf16.msra.mxu0 0
  %409 = vmatprep.subr.bf16.mxu0 0
  %410 = vmatpush1.bf16.msra.mxu0 0
  %411 = vmatprep.subr.bf16.mxu0 0
  %412 = vmatpush1.bf16.msra.mxu0 0
  %413 = vmatprep.subr.bf16.mxu0 0
  %414 = vmatpush1.bf16.msra.mxu0 0
  %415 = vmatprep.mubr.bf16.mxu0 0
  %416 = vmatmul.mubr.bf16.gmra.mrb[0].mxu0 %v284
  %v417 = vpop.f32.mrb[0].mxu0
  %v418 = vadd.f32 %v93, %v417
  %v419 = vpop.f32.mrb[0].mxu0
  %v420 = vpop.f32.mrb[0].mxu0
  %v421 = vadd.f32 %v93, %v420
  %v422 = vpop.f32.mrb[0].mxu0
  %423 = vmatprep.mubr.bf16.mxu0 0
  %424 = vmatmul.mubr.bf16.gmra.mrb[0].mxu0 %v287
  %v425 = vpop.f32.mrb[0].mxu0
  %v426 = vadd.f32 %v93, %v425
  %v427 = vpop.f32.mrb[0].mxu0
  %v428 = vpop.f32.mrb[0].mxu0
  %v429 = vadd.f32 %v93, %v428
  %v430 = vpop.f32.mrb[0].mxu0
  %431 = vmatprep.mubr.bf16.mxu0 0
  %432 = vmatmul.mubr.bf16.gmra.mrb[0].mxu0 %v290
  %v433 = vpop.f32.mrb[0].mxu0
  %v434 = vadd.f32 %v93, %v433
  %v435 = vpop.f32.mrb[0].mxu0
  %v436 = vpop.f32.mrb[0].mxu0
  %v437 = vadd.f32 %v93, %v436
  %v438 = vpop.f32.mrb[0].mxu0
  %439 = vmatprep.mubr.bf16.mxu0 0
  %440 = vmatmul.mubr.bf16.gmra.mrb[0].mxu0 %v293
  %v441 = vpop.f32.mrb[0].mxu0
  %v442 = vadd.f32 %v93, %v441
  %v443 = vpop.f32.mrb[0].mxu0
  %v444 = vpop.f32.mrb[0].mxu0
  %v445 = vadd.f32 %v93, %v444
  %v446 = vpop.f32.mrb[0].mxu0
  %447 = vmatprep.mubr.bf16.mxu0 0
  %448 = vmatmul.mubr.bf16.gmra.mrb[0].mxu0 %v296
  %v449 = vpop.f32.mrb[0].mxu0
  %v450 = vadd.f32 %v93, %v449
  %v451 = vpop.f32.mrb[0].mxu0
  %v452 = vpop.f32.mrb[0].mxu0
  %v453 = vadd.f32 %v93, %v452
  %v454 = vpop.f32.mrb[0].mxu0
  %455 = vmatprep.mubr.bf16.mxu0 0
  %456 = vmatmul.mubr.bf16.gmra.mrb[0].mxu0 %v299
  %v457 = vpop.f32.mrb[0].mxu0
  %v458 = vadd.f32 %v93, %v457
  %v459 = vpop.f32.mrb[0].mxu0
  %v460 = vpop.f32.mrb[0].mxu0
  %v461 = vadd.f32 %v93, %v460
  %v462 = vpop.f32.mrb[0].mxu0
  %463 = vmatprep.mubr.bf16.mxu0 0
  %464 = vmatmul.mubr.bf16.gmra.mrb[0].mxu0 %v302
  %v465 = vpop.f32.mrb[0].mxu0
  %v466 = vadd.f32 %v93, %v465
  %v467 = vpop.f32.mrb[0].mxu0
  %v468 = vpop.f32.mrb[0].mxu0
  %v469 = vadd.f32 %v93, %v468
  %v470 = vpop.f32.mrb[0].mxu0
  %471 = vmatprep.mubr.bf16.mxu0 0
  %472 = vmatmul.mubr.bf16.gmra.mrb[0].mxu0 %v305
  %v473 = vpop.f32.mrb[0].mxu0
  %v474 = vadd.f32 %v93, %v473
  %v475 = vpop.f32.mrb[0].mxu0
  %v476 = vpop.f32.mrb[0].mxu0
  %v477 = vadd.f32 %v93, %v476
  %v478 = vpop.f32.mrb[0].mxu0
  %479 = vmatprep.mubr.bf16.mxu0 0
  %480 = vmatmul.mubr.bf16.gmra.mrb[0].mxu0 %v308
  %v481 = vpop.f32.mrb[0].mxu0
  %v482 = vadd.f32 %v93, %v481
  %v483 = vpop.f32.mrb[0].mxu0
  %v484 = vpop.f32.mrb[0].mxu0
  %v485 = vadd.f32 %v93, %v484
  %v486 = vpop.f32.mrb[0].mxu0
  %487 = vmatprep.mubr.bf16.mxu0 0
  %488 = vmatmul.mubr.bf16.gmra.mrb[0].mxu0 %v311
  %v489 = vpop.f32.mrb[0].mxu0
  %v490 = vadd.f32 %v93, %v489
  %v491 = vpop.f32.mrb[0].mxu0
  %v492 = vpop.f32.mrb[0].mxu0
  %v493 = vadd.f32 %v93, %v492
  %v494 = vpop.f32.mrb[0].mxu0
  %495 = vmatprep.mubr.bf16.mxu0 0
  %496 = vmatmul.mubr.bf16.gmra.mrb[0].mxu0 %v314
  %v497 = vpop.f32.mrb[0].mxu0
  %v498 = vadd.f32 %v93, %v497
  %v499 = vpop.f32.mrb[0].mxu0
  %v500 = vpop.f32.mrb[0].mxu0
  %v501 = vadd.f32 %v93, %v500
  %v502 = vpop.f32.mrb[0].mxu0
  %503 = vmatprep.mubr.bf16.mxu0 0
  %504 = vmatmul.mubr.bf16.gmra.mrb[0].mxu0 %v317
  %v505 = vpop.f32.mrb[0].mxu0
  %v506 = vadd.f32 %v93, %v505
  %v507 = vpop.f32.mrb[0].mxu0
  %v508 = vpop.f32.mrb[0].mxu0
  %v509 = vadd.f32 %v93, %v508
  %v510 = vpop.f32.mrb[0].mxu0
  %511 = vmatprep.mubr.bf16.mxu0 0
  %512 = vmatmul.mubr.bf16.gmra.mrb[0].mxu0 %v320
  %v513 = vpop.f32.mrb[0].mxu0
  %v514 = vadd.f32 %v93, %v513
  %v515 = vpop.f32.mrb[0].mxu0
  %v516 = vpop.f32.mrb[0].mxu0
  %v517 = vadd.f32 %v93, %v516
  %v518 = vpop.f32.mrb[0].mxu0
  %519 = vmatprep.mubr.bf16.mxu0 0
  %520 = vmatmul.mubr.bf16.gmra.mrb[0].mxu0 %v323
  %v521 = vpop.f32.mrb[0].mxu0
  %v522 = vadd.f32 %v93, %v521
  %v523 = vpop.f32.mrb[0].mxu0
  %v524 = vpop.f32.mrb[0].mxu0
  %v525 = vadd.f32 %v93, %v524
  %v526 = vpop.f32.mrb[0].mxu0
  %527 = vmatprep.mubr.bf16.mxu0 0
  %528 = vmatmul.mubr.bf16.gmra.mrb[0].mxu0 %v326
  %v529 = vpop.f32.mrb[0].mxu0
  %v530 = vadd.f32 %v93, %v529
  %v531 = vpop.f32.mrb[0].mxu0
  %v532 = vpop.f32.mrb[0].mxu0
  %v533 = vadd.f32 %v93, %v532
  %v534 = vpop.f32.mrb[0].mxu0
  %535 = vmatprep.mubr.bf16.mxu0 0
  %536 = vmatmul.mubr.bf16.gmra.mrb[0].mxu0 %v329
  %v537 = vpop.f32.mrb[0].mxu0
  %v538 = vadd.f32 %v93, %v537
  %v539 = vpop.f32.mrb[0].mxu0
  %v540 = vpop.f32.mrb[0].mxu0
  %v541 = vadd.f32 %v93, %v540
  %v542 = vpop.f32.mrb[0].mxu0
  %543 = vmatprep.mubr.bf16.mxu0 0
  %544 = vmatmul.mubr.bf16.gmra.mrb[0].mxu0 %v332
  %v545 = vpop.f32.mrb[0].mxu0
  %v546 = vadd.f32 %v93, %v545
  %v547 = vpop.f32.mrb[0].mxu0
  %v548 = vpop.f32.mrb[0].mxu0
  %v549 = vadd.f32 %v93, %v548
  %v550 = vpop.f32.mrb[0].mxu0
  %551 = vmatprep.mubr.bf16.mxu0 0
  %552 = vmatmul.mubr.bf16.gmra.mrb[0].mxu0 %v335
  %v553 = vpop.f32.mrb[0].mxu0
  %v554 = vadd.f32 %v93, %v553
  %v555 = vpop.f32.mrb[0].mxu0
  %v556 = vpop.f32.mrb[0].mxu0
  %v557 = vadd.f32 %v93, %v556
  %v558 = vpop.f32.mrb[0].mxu0
  %559 = vmatprep.mubr.bf16.mxu0 0
  %560 = vmatmul.mubr.bf16.gmra.mrb[0].mxu0 %v338
  %v561 = vpop.f32.mrb[0].mxu0
  %v562 = vadd.f32 %v93, %v561
  %v563 = vpop.f32.mrb[0].mxu0
  %v564 = vpop.f32.mrb[0].mxu0
  %v565 = vadd.f32 %v93, %v564
  %v566 = vpop.f32.mrb[0].mxu0
  %567 = vmatprep.mubr.bf16.mxu0 0
  %568 = vmatmul.mubr.bf16.gmra.mrb[0].mxu0 %v341
  %v569 = vpop.f32.mrb[0].mxu0
  %v570 = vadd.f32 %v93, %v569
  %v571 = vpop.f32.mrb[0].mxu0
  %v572 = vpop.f32.mrb[0].mxu0
  %v573 = vadd.f32 %v93, %v572
  %v574 = vpop.f32.mrb[0].mxu0
  %575 = vmatprep.mubr.bf16.mxu0 0
  %576 = vmatmul.mubr.bf16.gmra.mrb[0].mxu0 %v344
  %v577 = vpop.f32.mrb[0].mxu0
  %v578 = vadd.f32 %v93, %v577
  %v579 = vpop.f32.mrb[0].mxu0
  %v580 = vpop.f32.mrb[0].mxu0
  %v581 = vadd.f32 %v93, %v580
  %v582 = vpop.f32.mrb[0].mxu0
  %583 = vmatprep.mubr.bf16.mxu0 0
  %584 = vmatmul.mubr.bf16.gmra.mrb[0].mxu0 %v347
  %v585 = vpop.f32.mrb[0].mxu0
  %v586 = vadd.f32 %v93, %v585
  %v587 = vpop.f32.mrb[0].mxu0
  %v588 = vpop.f32.mrb[0].mxu0
  %v589 = vadd.f32 %v93, %v588
  %v590 = vpop.f32.mrb[0].mxu0
  %591 = vmatprep.mubr.bf16.mxu0 0
  %592 = vmatmul.mubr.bf16.gmra.mrb[0].mxu0 %v350
  %v593 = vpop.f32.mrb[0].mxu0
  %v594 = vadd.f32 %v93, %v593
  %v595 = vpop.f32.mrb[0].mxu0
  %v596 = vpop.f32.mrb[0].mxu0
  %v597 = vadd.f32 %v93, %v596
  %v598 = vpop.f32.mrb[0].mxu0
  %599 = vmatprep.mubr.bf16.mxu0 0
  %600 = vmatmul.mubr.bf16.gmra.mrb[0].mxu0 %v353
  %v601 = vpop.f32.mrb[0].mxu0
  %v602 = vadd.f32 %v93, %v601
  %v603 = vpop.f32.mrb[0].mxu0
  %v604 = vpop.f32.mrb[0].mxu0
  %v605 = vadd.f32 %v93, %v604
  %v606 = vpop.f32.mrb[0].mxu0
  %607 = vmatprep.mubr.bf16.mxu0 0
  %608 = vmatmul.mubr.bf16.gmra.mrb[0].mxu0 %v356
  %v609 = vpop.f32.mrb[0].mxu0
  %v610 = vadd.f32 %v93, %v609
  %v611 = vpop.f32.mrb[0].mxu0
  %v612 = vpop.f32.mrb[0].mxu0
  %v613 = vadd.f32 %v93, %v612
  %v614 = vpop.f32.mrb[0].mxu0
  %615 = vmatprep.mubr.bf16.mxu0 0
  %616 = vmatmul.mubr.bf16.gmra.mrb[0].mxu0 %v359
  %v617 = vpop.f32.mrb[0].mxu0
  %v618 = vadd.f32 %v93, %v617
  %v619 = vpop.f32.mrb[0].mxu0
  %v620 = vpop.f32.mrb[0].mxu0
  %v621 = vadd.f32 %v93, %v620
  %v622 = vpop.f32.mrb[0].mxu0
  %623 = vmatprep.mubr.bf16.mxu0 0
  %624 = vmatmul.mubr.bf16.gmra.mrb[0].mxu0 %v362
  %v625 = vpop.f32.mrb[0].mxu0
  %v626 = vadd.f32 %v93, %v625
  %v627 = vpop.f32.mrb[0].mxu0
  %v628 = vpop.f32.mrb[0].mxu0
  %v629 = vadd.f32 %v93, %v628
  %v630 = vpop.f32.mrb[0].mxu0
  %631 = vmatprep.mubr.bf16.mxu0 0
  %632 = vmatmul.mubr.bf16.gmra.mrb[0].mxu0 %v365
  %v633 = vpop.f32.mrb[0].mxu0
  %v634 = vadd.f32 %v93, %v633
  %v635 = vpop.f32.mrb[0].mxu0
  %v636 = vpop.f32.mrb[0].mxu0
  %v637 = vadd.f32 %v93, %v636
  %v638 = vpop.f32.mrb[0].mxu0
  %639 = vmatprep.mubr.bf16.mxu0 0
  %640 = vmatmul.mubr.bf16.gmra.mrb[0].mxu0 %v368
  %v641 = vpop.f32.mrb[0].mxu0
  %v642 = vadd.f32 %v93, %v641
  %v643 = vpop.f32.mrb[0].mxu0
  %v644 = vpop.f32.mrb[0].mxu0
  %v645 = vadd.f32 %v93, %v644
  %v646 = vpop.f32.mrb[0].mxu0
  %647 = vmatprep.mubr.bf16.mxu0 0
  %648 = vmatmul.mubr.bf16.gmra.mrb[0].mxu0 %v371
  %v649 = vpop.f32.mrb[0].mxu0
  %v650 = vadd.f32 %v93, %v649
  %v651 = vpop.f32.mrb[0].mxu0
  %v652 = vpop.f32.mrb[0].mxu0
  %v653 = vadd.f32 %v93, %v652
  %v654 = vpop.f32.mrb[0].mxu0
  %655 = vmatprep.mubr.bf16.mxu0 0
  %656 = vmatmul.mubr.bf16.gmra.mrb[0].mxu0 %v374
  %v657 = vpop.f32.mrb[0].mxu0
  %v658 = vadd.f32 %v93, %v657
  %v659 = vpop.f32.mrb[0].mxu0
  %v660 = vpop.f32.mrb[0].mxu0
  %v661 = vadd.f32 %v93, %v660
  %v662 = vpop.f32.mrb[0].mxu0
  %663 = vmatprep.mubr.bf16.mxu0 0
  %664 = vmatmul.mubr.bf16.gmra.mrb[0].mxu0 %v377
  %v665 = vpop.f32.mrb[0].mxu0
  %v666 = vadd.f32 %v93, %v665
  %v667 = vpop.f32.mrb[0].mxu0
  %v668 = vpop.f32.mrb[0].mxu0
  %v669 = vadd.f32 %v93, %v668
  %v670 = vpop.f32.mrb[0].mxu0
  %671 = vdwg.mxu0
  %v672 = vtanh.pop %v418
  %v673 = vtanh.pop %v421
  %v674 = vtanh.pop %v426
  %v675 = vtanh.pop %v429
  %v676 = vtanh.pop %v434
  %v677 = vtanh.pop %v437
  %v678 = vtanh.pop %v442
  %v679 = vtanh.pop %v445
  %v680 = vtanh.pop %v450
  %v681 = vtanh.pop %v453
  %v682 = vtanh.pop %v458
  %v683 = vtanh.pop %v461
  %v684 = vtanh.pop %v466
  %v685 = vtanh.pop %v469
  %v686 = vtanh.pop %v474
  %v687 = vtanh.pop %v477
  %v688 = vtanh.pop %v482
  %v689 = vtanh.pop %v485
  %v690 = vtanh.pop %v490
  %v691 = vtanh.pop %v493
  %v692 = vtanh.pop %v498
  %v693 = vtanh.pop %v501
  %v694 = vtanh.pop %v506
  %v695 = vtanh.pop %v509
  %v696 = vtanh.pop %v514
  %v697 = vtanh.pop %v517
  %v698 = vtanh.pop %v522
  %v699 = vtanh.pop %v525
  %v700 = vtanh.pop %v530
  %v701 = vtanh.pop %v533
  %v702 = vtanh.pop %v538
  %v703 = vtanh.pop %v541
  %v704 = vtanh.pop %v546
  %v705 = vtanh.pop %v549
  %v706 = vtanh.pop %v554
  %v707 = vtanh.pop %v557
  %v708 = vtanh.pop %v562
  %v709 = vtanh.pop %v565
  %v710 = vtanh.pop %v570
  %v711 = vtanh.pop %v573
  %v712 = vtanh.pop %v578
  %v713 = vtanh.pop %v581
  %v714 = vtanh.pop %v586
  %v715 = vtanh.pop %v589
  %v716 = vtanh.pop %v594
  %v717 = vtanh.pop %v597
  %v718 = vtanh.pop %v602
  %v719 = vtanh.pop %v605
  %v720 = vtanh.pop %v610
  %v721 = vtanh.pop %v613
  %v722 = vtanh.pop %v618
  %v723 = vtanh.pop %v621
  %v724 = vtanh.pop %v626
  %v725 = vtanh.pop %v629
  %v726 = vtanh.pop %v634
  %v727 = vtanh.pop %v637
  %v728 = vtanh.pop %v642
  %v729 = vtanh.pop %v645
  %v730 = vtanh.pop %v650
  %v731 = vtanh.pop %v653
  %v732 = vtanh.pop %v658
  %v733 = vtanh.pop %v661
  %v734 = vtanh.pop %v666
  %v735 = vtanh.pop %v669
  %736 = vst [vmem:[%s3] sm:$0xff] %v672
  %737 = vst [vmem:[%s3 + $0x8] sm:$0xff] %v673
  %738 = vst [vmem:[%s3 + $0x10] sm:$0xff] %v674
  %739 = vst [vmem:[%s3 + $0x18] sm:$0xff] %v675
  %740 = vst [vmem:[%s3 + $0x20] sm:$0xff] %v676
  %741 = vst [vmem:[%s3 + $0x28] sm:$0xff] %v677
  %742 = vst [vmem:[%s3 + $0x30] sm:$0xff] %v678
  %743 = vst [vmem:[%s3 + $0x38] sm:$0xff] %v679
  %744 = vst [vmem:[%s3 + $0x40] sm:$0xff] %v680
  %745 = vst [vmem:[%s3 + $0x48] sm:$0xff] %v681
  %746 = vst [vmem:[%s3 + $0x50] sm:$0xff] %v682
  %747 = vst [vmem:[%s3 + $0x58] sm:$0xff] %v683
  %748 = vst [vmem:[%s3 + $0x60] sm:$0xff] %v684
  %749 = vst [vmem:[%s3 + $0x68] sm:$0xff] %v685
  %750 = vst [vmem:[%s3 + $0x70] sm:$0xff] %v686
  %751 = vst [vmem:[%s3 + $0x78] sm:$0xff] %v687
  %752 = vst [vmem:[%s3 + $0x80] sm:$0xff] %v688
  %753 = vst [vmem:[%s3 + $0x88] sm:$0xff] %v689
  %754 = vst [vmem:[%s3 + $0x90] sm:$0xff] %v690
  %755 = vst [vmem:[%s3 + $0x98] sm:$0xff] %v691
  %756 = vst [vmem:[%s3 + $0xa0] sm:$0xff] %v692
  %757 = vst [vmem:[%s3 + $0xa8] sm:$0xff] %v693
  %758 = vst [vmem:[%s3 + $0xb0] sm:$0xff] %v694
  %759 = vst [vmem:[%s3 + $0xb8] sm:$0xff] %v695
  %760 = vst [vmem:[%s3 + $0xc0] sm:$0xff] %v696
  %761 = vst [vmem:[%s3 + $0xc8] sm:$0xff] %v697
  %762 = vst [vmem:[%s3 + $0xd0] sm:$0xff] %v698
  %763 = vst [vmem:[%s3 + $0xd8] sm:$0xff] %v699
  %764 = vst [vmem:[%s3 + $0xe0] sm:$0xff] %v700
  %765 = vst [vmem:[%s3 + $0xe8] sm:$0xff] %v701
  %766 = vst [vmem:[%s3 + $0xf0] sm:$0xff] %v702
  %767 = vst [vmem:[%s3 + $0xf8] sm:$0xff] %v703
  %768 = vst [vmem:[%s3 + $0x100] sm:$0xff] %v704
  %769 = vst [vmem:[%s3 + $0x108] sm:$0xff] %v705
  %770 = vst [vmem:[%s3 + $0x110] sm:$0xff] %v706
  %771 = vst [vmem:[%s3 + $0x118] sm:$0xff] %v707
  %772 = vst [vmem:[%s3 + $0x120] sm:$0xff] %v708
  %773 = vst [vmem:[%s3 + $0x128] sm:$0xff] %v709
  %774 = vst [vmem:[%s3 + $0x130] sm:$0xff] %v710
  %775 = vst [vmem:[%s3 + $0x138] sm:$0xff] %v711
  %776 = vst [vmem:[%s3 + $0x140] sm:$0xff] %v712
  %777 = vst [vmem:[%s3 + $0x148] sm:$0xff] %v713
  %778 = vst [vmem:[%s3 + $0x150] sm:$0xff] %v714
  %779 = vst [vmem:[%s3 + $0x158] sm:$0xff] %v715
  %780 = vst [vmem:[%s3 + $0x160] sm:$0xff] %v716
  %781 = vst [vmem:[%s3 + $0x168] sm:$0xff] %v717
  %782 = vst [vmem:[%s3 + $0x170] sm:$0xff] %v718
  %783 = vst [vmem:[%s3 + $0x178] sm:$0xff] %v719
  %784 = vst [vmem:[%s3 + $0x180] sm:$0xff] %v720
  %785 = vst [vmem:[%s3 + $0x188] sm:$0xff] %v721
  %786 = vst [vmem:[%s3 + $0x190] sm:$0xff] %v722
  %787 = vst [vmem:[%s3 + $0x198] sm:$0xff] %v723
  %788 = vst [vmem:[%s3 + $0x1a0] sm:$0xff] %v724
  %789 = vst [vmem:[%s3 + $0x1a8] sm:$0xff] %v725
  %790 = vst [vmem:[%s3 + $0x1b0] sm:$0xff] %v726
  %791 = vst [vmem:[%s3 + $0x1b8] sm:$0xff] %v727
  %792 = vst [vmem:[%s3 + $0x1c0] sm:$0xff] %v728
  %793 = vst [vmem:[%s3 + $0x1c8] sm:$0xff] %v729
  %794 = vst [vmem:[%s3 + $0x1d0] sm:$0xff] %v730
  %795 = vst [vmem:[%s3 + $0x1d8] sm:$0xff] %v731
  %796 = vst [vmem:[%s3 + $0x1e0] sm:$0xff] %v732
  %797 = vst [vmem:[%s3 + $0x1e8] sm:$0xff] %v733
  %798 = vst [vmem:[%s3 + $0x1f0] sm:$0xff] %v734
  %799 = vst [vmem:[%s3 + $0x1f8] sm:$0xff] %v735
  // Predicated region
  $region14: #{ae_forward.17} parent=0 // pred_check
    _
  $region15: #{ae_forward.17} parent=0 // pred_check_branch
    %801 = sbr.rel (0) target = $region17
  $region16: #{ae_forward.17} parent=0 // pred_region
    _
  $region17: #{ae_forward.17} parent=0 // pred_fallthru
    _
  // Predicated region
  $region18: #{ae_forward.17} parent=0 // pred_check
    _
  $region19: #{ae_forward.17} parent=0 // pred_check_branch
    %803 = sbr.rel (0) target = $region21
  $region20: #{ae_forward.17} parent=0 // pred_region
    _
  $region21: #{ae_forward.17} parent=0 // pred_fallthru
    _

</llo_original>
